<compile_context>
chip_gen: v5e
topology: v5e:2x2
jax: 0.10.0
libtpu: 0.0.40
codegen_flags: <defaults>
</compile_context>

<pallas_src>
import functools

import jax
import jax.numpy as jnp
from jax.experimental import pallas as pl
from jax.experimental.pallas import tpu as pltpu


def _self_attention_kernel(x_ref, wqkv_ref, wu_ref, bias_ref, o_ref, *, heads, bb):
    """One grid step: `bb` batch elements, all heads.

    x_ref:    (bb, t, k)        f32 (cast to compute dtype in-kernel)
    wqkv_ref: (3*heads, k, k)   compute dtype, [q-heads | k-heads | v-heads]
    wu_ref:   (heads, k, k)     compute dtype
    bias_ref: (1, k)            f32
    o_ref:    (bb, t, k)        f32
    """
    cd = wqkv_ref.dtype
    _, t, k = x_ref.shape
    z = heads * bb                       # leading batch dim for all matmuls

    # Cast the tiny activation tile in-kernel (VALU slack, no HBM round trip).
    x = x_ref[...].astype(cd)                                             # (bb, t, k)
    # Replicate x across heads -> (z, t, k).  Leading-dim broadcast + leading
    # -dim reshape only: layout-trivial, no relayout.
    xz = jnp.broadcast_to(x[None], (heads, bb, t, k)).reshape(z, t, k)

    w_all = wqkv_ref[...]                                                 # (3h, k, k)

    def bcast_w(w):                      # (heads, k, k) -> (z, k, k), leading dims only
        return jnp.broadcast_to(w[:, None], (heads, bb, k, k)).reshape(z, k, k)

    wq = bcast_w(w_all[0:heads])
    wk = bcast_w(w_all[heads:2 * heads])
    wv = bcast_w(w_all[2 * heads:3 * heads])

    # Per-(head, batch) projections as leading-batched matmuls (bf16 operands,
    # f32 accumulation).  The k**-0.25 scaling of q and k is folded into wq/wk.
    q = jnp.einsum('znc,zcd->znd', xz, wq,
                   preferred_element_type=jnp.float32).astype(cd)         # (z, t, k)
    kk = jnp.einsum('znc,zcd->znd', xz, wk,
                    preferred_element_type=jnp.float32).astype(cd)        # (z, t, k)
    v = jnp.einsum('znc,zcd->znd', xz, wv,
                   preferred_element_type=jnp.float32).astype(cd)         # (z, t, k)

    # Attention scores + softmax (all f32).
    s = jnp.einsum('znd,zmd->znm', q, kk,
                   preferred_element_type=jnp.float32)                    # (z, t, t)
    s = s - jnp.max(s, axis=-1, keepdims=True)
    p = jnp.exp(s)
    p = p * pl.reciprocal(jnp.sum(p, axis=-1, keepdims=True), approx=True)
    # TODO(synk): dropout_attention omitted — module default drop_rate=0 (identity).

    out = jnp.einsum('znm,zmd->znd', p.astype(cd), v,
                     preferred_element_type=jnp.float32)                  # (z, t, k)

    # unifyheads: per-head projection then sum over heads (leading-dim reduce),
    # avoiding any lane-concatenate of the head outputs.
    per_head = jnp.einsum('znd,zdc->znc', out.astype(cd), bcast_w(wu_ref[...]),
                          preferred_element_type=jnp.float32)             # (z, t, k)
    final = jnp.sum(per_head.reshape(heads, bb, t, k), axis=0) + bias_ref[...]
    o_ref[...] = final.astype(o_ref.dtype)                                # (bb, t, k)


def prepare_weights(wq, wk, wv, wu, bu, compute_dtype=jnp.bfloat16):
    """One-time rearrangement of the PyTorch Linear weights into kernel layout.

    wq/wk/wv: (heads*k, k)  [PyTorch Linear (out_features, in_features)]
    wu: (k, heads*k), bu: (k,)

    Returns:
      wqkv3: (3*heads, k, k) compute_dtype — per-head right-multiply projection
             matrices, ordered [q-heads | k-heads | v-heads]; q/k pre-scaled by
             k**-0.25 (matching the reference scaling of queries and keys).
      wu3:   (heads, k, k)   compute_dtype — per-head unifyheads matrices.
      bias:  (1, k) float32.
    Hoist this out of the per-forward path.
    """
    hk, k = wq.shape
    heads = hk // k
    scale = float(k) ** -0.25
    # Per-head matrices such that q[h] = x @ wq3[h]  (i.e. wq3[h, c, d] = wq[h*k+d, c]).
    wq3 = jnp.transpose(wq.reshape(heads, k, k), (0, 2, 1)) * scale
    wk3 = jnp.transpose(wk.reshape(heads, k, k), (0, 2, 1)) * scale
    wv3 = jnp.transpose(wv.reshape(heads, k, k), (0, 2, 1))
    wqkv3 = jnp.concatenate([wq3, wk3, wv3], axis=0).astype(compute_dtype)
    # wu3[h, d, c] = wu[c, h*k + d]  so  final = sum_h out[h] @ wu3[h] + bu.
    wu3 = wu.T.reshape(heads, k, k).astype(compute_dtype)
    bias = bu.reshape(1, k).astype(jnp.float32)
    return wqkv3, wu3, bias


def self_attention_pallas(x, wqkv3, wu3, bias, heads, *, num_batch_blocks=None):
    """x: (b, t, k) f32. wqkv3: (3*heads, k, k). wu3: (heads, k, k). bias: (1, k)."""
    b, t, k = x.shape
    if num_batch_blocks is None:
        # 2 "parallel" grid steps (half the batch each) keep both v7x
        # TensorCores busy; on single-TC v5e/v6e the extra step costs ~0.4 us.
        # Pass num_batch_blocks=1 there to fully collapse the grid.
        num_batch_blocks = 2 if (b % 2 == 0 and b >= 2) else 1
    assert b % num_batch_blocks == 0, "batch must divide num_batch_blocks"
    bb = b // num_batch_blocks

    kernel = functools.partial(_self_attention_kernel, heads=heads, bb=bb)
    return pl.pallas_call(
        kernel,
        out_shape=jax.ShapeDtypeStruct((b, t, k), jnp.float32),
        grid_spec=pltpu.PrefetchScalarGridSpec(
            num_scalar_prefetch=0,
            grid=(num_batch_blocks,),
            in_specs=[
                pl.BlockSpec((bb, t, k), lambda i: (i, 0, 0)),           # x (f32)
                pl.BlockSpec((3 * heads, k, k), lambda i: (0, 0, 0)),    # Wqkv (resident)
                pl.BlockSpec((heads, k, k), lambda i: (0, 0, 0)),        # Wu (resident)
                pl.BlockSpec((1, k), lambda i: (0, 0)),                  # bias
            ],
            out_specs=pl.BlockSpec((bb, t, k), lambda i: (i, 0, 0)),
        ),
        compiler_params=pltpu.CompilerParams(
            dimension_semantics=("parallel",)),
    )(x, wqkv3, wu3, bias)


def self_attention_reference(x, wq, wk, wv, wu, bu, heads):
    """Pure-JAX transcription of the PyTorch forward (for correctness check)."""
    b, t, k = x.shape
    h = heads
    q = (x @ wq.T).reshape(b, t, h, k).transpose(0, 2, 1, 3).reshape(b * h, t, k)
    kk = (x @ wk.T).reshape(b, t, h, k).transpose(0, 2, 1, 3).reshape(b * h, t, k)
    v = (x @ wv.T).reshape(b, t, h, k).transpose(0, 2, 1, 3).reshape(b * h, t, k)
    q = q / (k ** 0.25)
    kk = kk / (k ** 0.25)
    dot = jnp.einsum('btk,bsk->bts', q, kk)
    dot = jax.nn.softmax(dot, axis=2)
    out = jnp.einsum('bts,bsk->btk', dot, v).reshape(b, h, t, k)
    out = out.transpose(0, 2, 1, 3).reshape(b, t, h * k)
    return out @ wu.T + bu


if __name__ == "__main__":
    b, t, k, heads = 2, 8, 32, 8

    key = jax.random.PRNGKey(0)
    kx, kq, kk_, kv, ku, kb = jax.random.split(key, 6)

    x = jax.random.normal(kx, (b, t, k), dtype=jnp.float32)
    # PyTorch Linear layout: (out_features, in_features).
    wq = jax.random.normal(kq, (heads * k, k), dtype=jnp.float32) * 0.1
    wk = jax.random.normal(kk_, (heads * k, k), dtype=jnp.float32) * 0.1
    wv = jax.random.normal(kv, (heads * k, k), dtype=jnp.float32) * 0.1
    wu = jax.random.normal(ku, (k, heads * k), dtype=jnp.float32) * 0.1
    bu = jax.random.normal(kb, (k,), dtype=jnp.float32) * 0.1

    ref = self_attention_reference(x, wq, wk, wv, wu, bu, heads)

    # ---- f32 weights: tight structural-correctness check, both grid layouts.
    wqkv_f32, wu_f32, bias_f32 = prepare_weights(wq, wk, wv, wu, bu, jnp.float32)
    out_f32 = jax.block_until_ready(
        self_attention_pallas(x, wqkv_f32, wu_f32, bias_f32, heads))
    assert out_f32.shape == (b, t, k)
    assert jnp.allclose(out_f32, ref, atol=5e-3, rtol=5e-3), "f32 mismatch (2-step grid)"

    out_f32_collapsed = jax.block_until_ready(
        self_attention_pallas(x, wqkv_f32, wu_f32, bias_f32, heads, num_batch_blocks=1))
    assert jnp.allclose(out_f32_collapsed, ref, atol=5e-3, rtol=5e-3), \
        "f32 mismatch (collapsed grid, multi-batch step)"

    # ---- bf16 weights (production path): MXU-native operands, f32 accumulation.
    wqkv_bf, wu_bf, bias_bf = prepare_weights(wq, wk, wv, wu, bu, jnp.bfloat16)
    out_bf = jax.block_until_ready(
        self_attention_pallas(x, wqkv_bf, wu_bf, bias_bf, heads))
    assert out_bf.shape == (b, t, k)
    assert jnp.allclose(out_bf, ref, atol=5e-2, rtol=5e-2), "bf16 mismatch"

    print("KERNEL_OK")
</pallas_src>

<mosaic_0001>
module attributes {stable_mosaic.version = 11 : i64} {
  func.func @_self_attention_kernel(%arg0: i32, %arg1: memref<1x8x32xf32, #tpu.memory_space<vmem>>, %arg2: memref<24x32x32xf32, #tpu.memory_space<vmem>>, %arg3: memref<8x32x32xf32, #tpu.memory_space<vmem>>, %arg4: memref<1x32xf32, #tpu.memory_space<vmem>>, %arg5: memref<1x8x32xf32, #tpu.memory_space<vmem>>) attributes {dimension_semantics = [#tpu.dimension_semantics<parallel>], iteration_bounds = array<i64: 2>, scalar_prefetch = 0 : i64, scratch_operands = 0 : i64, tpu.core_type = #tpu.core_type<tc>, window_params = [{transform_indices = @transform_0, window_bounds = array<i64: 1, 8, 32>}, {pipeline_mode = #tpu.pipeline_mode<synchronous>, transform_indices = @transform_1, window_bounds = array<i64: 24, 32, 32>}, {pipeline_mode = #tpu.pipeline_mode<synchronous>, transform_indices = @transform_2, window_bounds = array<i64: 8, 32, 32>}, {pipeline_mode = #tpu.pipeline_mode<synchronous>, transform_indices = @transform_3, window_bounds = array<i64: 1, 32>}, {transform_indices = @transform_4, window_bounds = array<i64: 1, 8, 32>}]} {
    %c0 = arith.constant 0 : index
    %c0_0 = arith.constant 0 : index
    %c0_1 = arith.constant 0 : index
    %0 = vector.load %arg1[%c0, %c0_0, %c0_1] : memref<1x8x32xf32, #tpu.memory_space<vmem>>, vector<1x8x32xf32>
    %1 = vector.shape_cast %0 : vector<1x8x32xf32> to vector<1x1x8x32xf32>
    %2 = vector.shape_cast %1 : vector<1x1x8x32xf32> to vector<1x1x8x32xf32>
    %3 = vector.broadcast %2 : vector<1x1x8x32xf32> to vector<8x1x8x32xf32>
    %4 = vector.shape_cast %3 : vector<8x1x8x32xf32> to vector<8x8x32xf32>
    %c0_2 = arith.constant 0 : index
    %c0_3 = arith.constant 0 : index
    %c0_4 = arith.constant 0 : index
    %5 = vector.load %arg2[%c0_2, %c0_3, %c0_4] : memref<24x32x32xf32, #tpu.memory_space<vmem>>, vector<24x32x32xf32>
    %6 = vector.extract_strided_slice %5 {offsets = [0, 0, 0], sizes = [8, 32, 32], strides = [1, 1, 1]} : vector<24x32x32xf32> to vector<8x32x32xf32>
    %7 = vector.shape_cast %6 : vector<8x32x32xf32> to vector<8x1x32x32xf32>
    %8 = vector.shape_cast %7 : vector<8x1x32x32xf32> to vector<8x32x32xf32>
    %9 = vector.extract_strided_slice %5 {offsets = [8, 0, 0], sizes = [8, 32, 32], strides = [1, 1, 1]} : vector<24x32x32xf32> to vector<8x32x32xf32>
    %10 = vector.shape_cast %9 : vector<8x32x32xf32> to vector<8x1x32x32xf32>
    %11 = vector.shape_cast %10 : vector<8x1x32x32xf32> to vector<8x32x32xf32>
    %12 = vector.extract_strided_slice %5 {offsets = [16, 0, 0], sizes = [8, 32, 32], strides = [1, 1, 1]} : vector<24x32x32xf32> to vector<8x32x32xf32>
    %13 = vector.shape_cast %12 : vector<8x32x32xf32> to vector<8x1x32x32xf32>
    %14 = vector.shape_cast %13 : vector<8x1x32x32xf32> to vector<8x32x32xf32>
    "tpu.trace_start"() <{level = 10 : i32, message = "znc,zcd->znd"}> : () -> ()
    %cst = arith.constant dense<0.000000e+00> : vector<8x8x32xf32>
    %15 = tpu.matmul %4, %8, %cst {dimension_numbers = #tpu.dot_dimension_numbers<[2], [1], [1], [2], [0, 0, 0, 1, 1, 2], [0], [0]>} : vector<8x8x32xf32>, vector<8x32x32xf32>, vector<8x8x32xf32> -> vector<8x8x32xf32>
    %cst_5 = arith.constant dense<0.000000e+00> : vector<8x8x32xf32>
    %16 = tpu.matmul %4, %11, %cst_5 {dimension_numbers = #tpu.dot_dimension_numbers<[2], [1], [1], [2], [0, 0, 0, 1, 1, 2], [0], [0]>} : vector<8x8x32xf32>, vector<8x32x32xf32>, vector<8x8x32xf32> -> vector<8x8x32xf32>
    %cst_6 = arith.constant dense<0.000000e+00> : vector<8x8x32xf32>
    %17 = tpu.matmul %4, %14, %cst_6 {dimension_numbers = #tpu.dot_dimension_numbers<[2], [1], [1], [2], [0, 0, 0, 1, 1, 2], [0], [0]>} : vector<8x8x32xf32>, vector<8x32x32xf32>, vector<8x8x32xf32> -> vector<8x8x32xf32>
    "tpu.trace_stop"() : () -> ()
    "tpu.trace_start"() <{level = 10 : i32, message = "znd,zmd->znm"}> : () -> ()
    %cst_7 = arith.constant dense<0.000000e+00> : vector<8x8x8xf32>
    %18 = tpu.matmul %15, %16, %cst_7 {dimension_numbers = #tpu.dot_dimension_numbers<[2], [2], [1], [1], [0, 0, 0, 1, 1, 1], [0], [0]>} : vector<8x8x32xf32>, vector<8x8x32xf32>, vector<8x8x8xf32> -> vector<8x8x8xf32>
    "tpu.trace_stop"() : () -> ()
    %cst_8 = arith.constant dense<0xFF800000> : vector<8x8xf32>
    %19 = vector.multi_reduction <maximumf>, %18, %cst_8 [2] : vector<8x8x8xf32> to vector<8x8xf32>
    %20 = vector.shape_cast %19 : vector<8x8xf32> to vector<8x8x1xf32>
    %21 = vector.broadcast %20 : vector<8x8x1xf32> to vector<8x8x8xf32>
    %22 = arith.subf %18, %21 : vector<8x8x8xf32>
    %23 = math.exp %22 : vector<8x8x8xf32>
    %cst_9 = arith.constant dense<0.000000e+00> : vector<8x8xf32>
    %24 = vector.multi_reduction <add>, %23, %cst_9 [2] : vector<8x8x8xf32> to vector<8x8xf32>
    %25 = vector.shape_cast %24 : vector<8x8xf32> to vector<8x8x1xf32>
    %26 = tpu.reciprocal %25 {approx = true} : vector<8x8x1xf32> -> vector<8x8x1xf32>
    %27 = vector.broadcast %26 : vector<8x8x1xf32> to vector<8x8x8xf32>
    %28 = arith.mulf %23, %27 : vector<8x8x8xf32>
    "tpu.trace_start"() <{level = 10 : i32, message = "znm,zmd->znd"}> : () -> ()
    %cst_10 = arith.constant dense<0.000000e+00> : vector<8x8x32xf32>
    %29 = tpu.matmul %28, %17, %cst_10 {dimension_numbers = #tpu.dot_dimension_numbers<[2], [1], [1], [2], [0, 0, 0, 1, 1, 2], [0], [0]>} : vector<8x8x8xf32>, vector<8x8x32xf32>, vector<8x8x32xf32> -> vector<8x8x32xf32>
    "tpu.trace_stop"() : () -> ()
    %c0_11 = arith.constant 0 : index
    %c0_12 = arith.constant 0 : index
    %c0_13 = arith.constant 0 : index
    %30 = vector.load %arg3[%c0_11, %c0_12, %c0_13] : memref<8x32x32xf32, #tpu.memory_space<vmem>>, vector<8x32x32xf32>
    %31 = vector.shape_cast %30 : vector<8x32x32xf32> to vector<8x1x32x32xf32>
    %32 = vector.shape_cast %31 : vector<8x1x32x32xf32> to vector<8x32x32xf32>
    "tpu.trace_start"() <{level = 10 : i32, message = "znd,zdc->znc"}> : () -> ()
    %cst_14 = arith.constant dense<0.000000e+00> : vector<8x8x32xf32>
    %33 = tpu.matmul %29, %32, %cst_14 {dimension_numbers = #tpu.dot_dimension_numbers<[2], [1], [1], [2], [0, 0, 0, 1, 1, 2], [0], [0]>} : vector<8x8x32xf32>, vector<8x32x32xf32>, vector<8x8x32xf32> -> vector<8x8x32xf32>
    "tpu.trace_stop"() : () -> ()
    %34 = vector.shape_cast %33 : vector<8x8x32xf32> to vector<8x1x8x32xf32>
    %cst_15 = arith.constant dense<0.000000e+00> : vector<1x8x32xf32>
    %35 = vector.multi_reduction <add>, %34, %cst_15 [0] : vector<8x1x8x32xf32> to vector<1x8x32xf32>
    %c0_16 = arith.constant 0 : index
    %c0_17 = arith.constant 0 : index
    %36 = vector.load %arg4[%c0_16, %c0_17] : memref<1x32xf32, #tpu.memory_space<vmem>>, vector<1x32xf32>
    %37 = vector.shape_cast %36 : vector<1x32xf32> to vector<1x1x32xf32>
    %38 = vector.broadcast %37 : vector<1x1x32xf32> to vector<1x8x32xf32>
    %39 = arith.addf %35, %38 : vector<1x8x32xf32>
    %c0_18 = arith.constant 0 : index
    %c0_19 = arith.constant 0 : index
    %c0_20 = arith.constant 0 : index
    %40 = vector.load %arg5[%c0_18, %c0_19, %c0_20] : memref<1x8x32xf32, #tpu.memory_space<vmem>>, vector<1x8x32xf32>
    tpu.vector_store %arg5[%c0_18, %c0_19, %c0_20], %39 {strides = array<i32>} : memref<1x8x32xf32, #tpu.memory_space<vmem>>, vector<1x8x32xf32>,
    return
  }
  func.func @transform_0(%arg0: i32) -> (i32, i32, i32) {
    %c0_i32 = arith.constant 0 : i32
    %c0_i32_0 = arith.constant 0 : i32
    %c0_i32_1 = arith.constant 0 : i32
    return %arg0, %c0_i32, %c0_i32_0 : i32, i32, i32
  }
  func.func @transform_1(%arg0: i32) -> (i32, i32, i32) {
    %c0_i32 = arith.constant 0 : i32
    %c0_i32_0 = arith.constant 0 : i32
    %c0_i32_1 = arith.constant 0 : i32
    %c0_i32_2 = arith.constant 0 : i32
    return %c0_i32, %c0_i32_0, %c0_i32_1 : i32, i32, i32
  }
  func.func @transform_2(%arg0: i32) -> (i32, i32, i32) {
    %c0_i32 = arith.constant 0 : i32
    %c0_i32_0 = arith.constant 0 : i32
    %c0_i32_1 = arith.constant 0 : i32
    %c0_i32_2 = arith.constant 0 : i32
    return %c0_i32, %c0_i32_0, %c0_i32_1 : i32, i32, i32
  }
  func.func @transform_3(%arg0: i32) -> (i32, i32) {
    %c0_i32 = arith.constant 0 : i32
    %c0_i32_0 = arith.constant 0 : i32
    %c0_i32_1 = arith.constant 0 : i32
    return %c0_i32, %c0_i32_0 : i32, i32
  }
  func.func @transform_4(%arg0: i32) -> (i32, i32, i32) {
    %c0_i32 = arith.constant 0 : i32
    %c0_i32_0 = arith.constant 0 : i32
    %c0_i32_1 = arith.constant 0 : i32
    return %arg0, %c0_i32, %c0_i32_0 : i32, i32, i32
  }
}

</mosaic_0001>

<llo_original>
// kernel: tpu_custom_call.1
$region0: #{tpu_custom_call.1}
  #allocation0 [shape = 'u32[]', space=smem, size = 0x4, offset = 0x4, fixed_abs, tag = 'smem constant byte address 0x4 - core index']
  #allocation1 [shape = 'u32[72,128]{1,0:T(1,128)}', space=vmem, size = 0x9000, scoped, tag = 'internal scratch']
  %s0 = inlined_call_operand.hbm [shape: f32[2,8,32], index: 0, kind: input, shape index: {}]
  %s1 = inlined_call_operand.hbm [shape: f32[24,32,32], index: 1, kind: input, shape index: {}]
  %s2 = inlined_call_operand.hbm [shape: f32[8,32,32], index: 2, kind: input, shape index: {}]
  %s3 = inlined_call_operand.vmem [shape: f32[1,32], index: 3, kind: input, shape index: {}]
  %s4 = inlined_call_operand.hbm [shape: f32[2,8,32], index: 4, kind: output, shape index: {}]
  %s5 = sld [smem:[#allocation0]]
  $region61: #{tpu_custom_call.1} parent=0
    _
  %s7 = ssub.s32 1, %s5
  %s8 = scalar_select 0, %s7, %s5
  $region1: #{tpu_custom_call.1} parent=0
    #allocation2 [shape = 'u8[8192]{0}', space=vmem, size = 0x2000, scoped, tag = 'input window, operand 0']
    #allocation3 [shape = 's32[2]{0}', space=sflag, size = 0x8, scoped, tag = 'scoped memory for tpu_custom_call.1']
    #allocation4 [shape = 's32[2]{0}', space=sflag, size = 0x8, scoped, tag = 'scoped memory for tpu_custom_call.1']
    #allocation5 [shape = 'u8[393216]{0}', space=vmem, size = 0x60000, scoped, tag = 'input window, operand 1, single buffered']
    #allocation6 [shape = 's32[1]{0}', space=sflag, size = 0x4, scoped, tag = 'scoped memory for tpu_custom_call.1']
    #allocation7 [shape = 'u8[131072]{0}', space=vmem, size = 0x20000, scoped, tag = 'input window, operand 2, single buffered']
    #allocation8 [shape = 'u8[8192]{0}', space=vmem, size = 0x2000, scoped, tag = 'output window, operand 0']
    %9 = vsyncpa [#allocation3], 0
    %s10 = scalar_lea.sflag [#allocation3], 1
    %11 = vsyncpa %s10, 0
    %12 = vsyncpa [#allocation6], 0
    %13 = vsyncpa [#allocation4], 0
    %s14 = scalar_lea.sflag [#allocation4], 1
    %15 = vsyncpa %s14, 0
    loop: start=0, step=1, limit=4
    $region2: #{tpu_custom_call.1} parent=1 // loop_pre_header
      _
    $region3: #{tpu_custom_call.1} parent=1 // loop_header
      %s17 = sphi 0, %s21
      %p18 = scmp.ge.s32.totalorder %s17, 4
      %s27 = sphi 0, %s29
      %s30 = sphi 0, %s27
      %s31 = sphi 0, %s30
      %s47 = sphi 0, %s31
      %s51 = sphi 0, %s51
      %s53 = sphi 0, %s51
      %s54 = sphi 0, %s53
      %s68 = sphi 0, %s54
      %s72 = sphi 0, %s72
      %s74 = sphi 0, %s72
      %s75 = sphi 0, %s74
      %s89 = sphi 0, %s75
      %s93 = sphi 0, %s93
      %s95 = sphi 0, %s93
      %s96 = sphi 0, %s95
      %s110 = sphi 0, %s96
      %s116 = sphi 0, %s118
      %s119 = sphi 0, %s116
      %s120 = sphi 0, %s119
      %s136 = sphi 0, %s120
    $region4: #{tpu_custom_call.1} parent=1 // loop_header_branch
      %20 = sbr.rel (%p18) target = $region8
    $region5: #{tpu_custom_call.1} parent=1 // loop_body
      %s22 = ssub.s32 %s17, 1
      %s23 = ssub.s32 %s17, 2
      %s24 = sadd.s32 %s17, 1
      %s25 = ssub.s32 %s17, %s24
      %p26 = scmp.eq.s32.totalorder %s25, 0
      %s28 = sadd.s32 %s27, 1
      %s29 = scalar_select %p26, %s27, %s28
      %p32 = pneg %p26
      %p33 = scmp.eq.s32.totalorder %s17, 1
      %p34 = por %p32, %p33
      %p35 = scmp.ne.s32.totalorder %s27, %s30
      %p36 = scmp.eq.s32.totalorder %s17, 0
      %p37 = por %p35, %p36
      %p38 = scmp.ne.s32.totalorder %s27, %s30
      %p39 = scmp.eq.s32.totalorder %s22, 1
      %p40 = por %p38, %p39
      %p41 = scmp.ne.s32.totalorder %s30, %s31
      %p42 = scmp.eq.s32.totalorder %s22, 0
      %p43 = por %p41, %p42
      %p44 = scmp.ne.s32.totalorder %s30, %s31
      %p45 = scmp.eq.s32.totalorder %s23, 1
      %p46 = por %p44, %p45
      %p48 = scmp.ne.s32.totalorder %s31, %s47
      %p49 = scmp.eq.s32.totalorder %s23, 0
      %p50 = por %p48, %p49
      %s52 = sadd.s32 %s51, 1
      %p55 = scmp.eq.s32.totalorder %s17, 1
      %p56 = scmp.ne.s32.totalorder %s51, %s53
      %p57 = scmp.eq.s32.totalorder %s17, 0
      %p58 = por %p56, %p57
      %p59 = scmp.ne.s32.totalorder %s51, %s53
      %p60 = scmp.eq.s32.totalorder %s22, 1
      %p61 = por %p59, %p60
      %p62 = scmp.ne.s32.totalorder %s53, %s54
      %p63 = scmp.eq.s32.totalorder %s22, 0
      %p64 = por %p62, %p63
      %p65 = scmp.ne.s32.totalorder %s53, %s54
      %p66 = scmp.eq.s32.totalorder %s23, 1
      %p67 = por %p65, %p66
      %p69 = scmp.ne.s32.totalorder %s54, %s68
      %p70 = scmp.eq.s32.totalorder %s23, 0
      %p71 = por %p69, %p70
      %s73 = sadd.s32 %s72, 1
      %p76 = scmp.eq.s32.totalorder %s17, 1
      %p77 = scmp.ne.s32.totalorder %s72, %s74
      %p78 = scmp.eq.s32.totalorder %s17, 0
      %p79 = por %p77, %p78
      %p80 = scmp.ne.s32.totalorder %s72, %s74
      %p81 = scmp.eq.s32.totalorder %s22, 1
      %p82 = por %p80, %p81
      %p83 = scmp.ne.s32.totalorder %s74, %s75
      %p84 = scmp.eq.s32.totalorder %s22, 0
      %p85 = por %p83, %p84
      %p86 = scmp.ne.s32.totalorder %s74, %s75
      %p87 = scmp.eq.s32.totalorder %s23, 1
      %p88 = por %p86, %p87
      %p90 = scmp.ne.s32.totalorder %s75, %s89
      %p91 = scmp.eq.s32.totalorder %s23, 0
      %p92 = por %p90, %p91
      %s94 = sadd.s32 %s93, 1
      %p97 = scmp.eq.s32.totalorder %s17, 1
      %p98 = scmp.ne.s32.totalorder %s93, %s95
      %p99 = scmp.eq.s32.totalorder %s17, 0
      %p100 = por %p98, %p99
      %p101 = scmp.ne.s32.totalorder %s93, %s95
      %p102 = scmp.eq.s32.totalorder %s22, 1
      %p103 = por %p101, %p102
      %p104 = scmp.ne.s32.totalorder %s95, %s96
      %p105 = scmp.eq.s32.totalorder %s22, 0
      %p106 = por %p104, %p105
      %p107 = scmp.ne.s32.totalorder %s95, %s96
      %p108 = scmp.eq.s32.totalorder %s23, 1
      %p109 = por %p107, %p108
      %p111 = scmp.ne.s32.totalorder %s96, %s110
      %p112 = scmp.eq.s32.totalorder %s23, 0
      %p113 = por %p111, %p112
      %s114 = ssub.s32 %s17, %s24
      %p115 = scmp.eq.s32.totalorder %s114, 0
      %s117 = sadd.s32 %s116, 1
      %s118 = scalar_select %p115, %s116, %s117
      %p121 = pneg %p115
      %p122 = scmp.eq.s32.totalorder %s17, 1
      %p123 = por %p121, %p122
      %p124 = scmp.ne.s32.totalorder %s116, %s119
      %p125 = scmp.eq.s32.totalorder %s17, 0
      %p126 = por %p124, %p125
      %p127 = scmp.ne.s32.totalorder %s116, %s119
      %p128 = scmp.eq.s32.totalorder %s22, 1
      %p129 = por %p127, %p128
      %p130 = scmp.ne.s32.totalorder %s119, %s120
      %p131 = scmp.eq.s32.totalorder %s22, 0
      %p132 = por %p130, %p131
      %p133 = scmp.ne.s32.totalorder %s119, %s120
      %p134 = scmp.eq.s32.totalorder %s23, 1
      %p135 = por %p133, %p134
      %p137 = scmp.ne.s32.totalorder %s120, %s136
      %p138 = scmp.eq.s32.totalorder %s23, 0
      %p139 = por %p137, %p138
      %p140 = scmp.le.s32.totalorder 1, %s17
      %p141 = scmp.lt.s32.totalorder %s17, 3
      %p142 = pnand %p140, %p141
      %p143 = pneg %p142
      // Predicated region
      $region9: #{tpu_custom_call.1} parent=5 // pred_check
        _
      $region10: #{tpu_custom_call.1} parent=5 // pred_check_branch
        %145 = sbr.rel (%p142) target = $region12
      $region11: #{tpu_custom_call.1} parent=5 // pred_region
        %s146 = ssub.s32 %s17, 1
        // Predicated region
        $region13: #{tpu_custom_call.1} parent=11 // pred_check
          %p147 = pneg %p64
        $region14: #{tpu_custom_call.1} parent=11 // pred_check_branch
          %149 = sbr.rel (%p147) target = $region16
        $region15: #{tpu_custom_call.1} parent=11 // pred_region
          %151 = vsyncadd [#allocation6], 0
          %s152 = sshll.u32 %s1, 4
          %s153 = int_to_ptr.hbm [resolvable:$true] %s152
          %s154 = sshll.u32 [#allocation5], 4
          %s155 = int_to_ptr.vmem [resolvable:$true] %s154
          %160 = dma.hbm_to_vmem [thread:$0]  %s153, 12288, %s155, [#allocation6], 128, 128, 8
        $region16: #{tpu_custom_call.1} parent=11 // pred_fallthru
          _
        // Predicated region
        $region17: #{tpu_custom_call.1} parent=11 // pred_check
          %p161 = pneg %p85
        $region18: #{tpu_custom_call.1} parent=11 // pred_check_branch
          %163 = sbr.rel (%p161) target = $region20
        $region19: #{tpu_custom_call.1} parent=11 // pred_region
          %165 = vsyncadd [#allocation6], 0
          %s166 = sshll.u32 %s2, 4
          %s167 = int_to_ptr.hbm [resolvable:$true] %s166
          %s168 = sshll.u32 [#allocation7], 4
          %s169 = int_to_ptr.vmem [resolvable:$true] %s168
          %174 = dma.hbm_to_vmem [thread:$0]  %s167, 4096, %s169, [#allocation6], 128, 128, 8
        $region20: #{tpu_custom_call.1} parent=11 // pred_fallthru
          _
        // Predicated region
        $region21: #{tpu_custom_call.1} parent=11 // pred_check
          %p175 = pneg %p106
        $region22: #{tpu_custom_call.1} parent=11 // pred_check_branch
          %177 = sbr.rel (%p175) target = $region24
        $region23: #{tpu_custom_call.1} parent=11 // pred_region
          _
        $region24: #{tpu_custom_call.1} parent=11 // pred_fallthru
          _
      $region12: #{tpu_custom_call.1} parent=5 // pred_fallthru
        _
      %p178 = scmp.lt.s32.totalorder %s17, 2
      // Predicated region
      $region25: #{tpu_custom_call.1} parent=5 // pred_check
        %p179 = pneg %p178
      $region26: #{tpu_custom_call.1} parent=5 // pred_check_branch
        %181 = sbr.rel (%p179) target = $region28
      $region27: #{tpu_custom_call.1} parent=5 // pred_region
        // Predicated region
        $region29: #{tpu_custom_call.1} parent=27 // pred_check
          %p182 = pneg %p37
        $region30: #{tpu_custom_call.1} parent=27 // pred_check_branch
          %184 = sbr.rel (%p182) target = $region32
        $region31: #{tpu_custom_call.1} parent=27 // pred_region
          %s185 = sand.u32 %s27, 1
          %s186 = scalar_lea.sflag [#allocation3], %s185
          %s187 = sand.u32 %s27, 1
          %s188 = smul.addr %s187, 8
          %s189 = scalar_lea.vmem [#allocation2], %s188
          %191 = vsyncadd %s186, 0
          %s192 = smul.addr %s17, 8
          %s193 = scalar_lea.hbm %s0, %s192
          %s195 = sshll.u32 %s193, 4
          %s196 = int_to_ptr.hbm [resolvable:$true] %s195
          %s197 = sshll.u32 %s189, 4
          %s198 = int_to_ptr.vmem [resolvable:$true] %s197
          %200 = dma.hbm_to_vmem [thread:$0]  %s196, 128, %s198, %s186
        $region32: #{tpu_custom_call.1} parent=27 // pred_fallthru
          _
      $region28: #{tpu_custom_call.1} parent=5 // pred_fallthru
        _
      %p201 = scmp.le.s32.totalorder 1, %s17
      %p202 = scmp.lt.s32.totalorder %s17, 3
      %p203 = pnand %p201, %p202
      %p204 = pneg %p203
      // Predicated region
      $region33: #{tpu_custom_call.1} parent=5 // pred_check
        _
      $region34: #{tpu_custom_call.1} parent=5 // pred_check_branch
        %206 = sbr.rel (%p203) target = $region36
      $region35: #{tpu_custom_call.1} parent=5 // pred_region
        %s207 = ssub.s32 %s17, 1
        %s208 = sand.u32 %s30, 1
        %s209 = scalar_lea.sflag [#allocation3], %s208
        %s210 = sand.u32 %s30, 1
        %s211 = smul.addr %s210, 8
        %s212 = scalar_lea.vmem [#allocation2], %s211
        // Predicated region
        $region37: #{tpu_custom_call.1} parent=35 // pred_check
          %p213 = pneg %p43
        $region38: #{tpu_custom_call.1} parent=35 // pred_check_branch
          %215 = sbr.rel (%p213) target = $region40
        $region39: #{tpu_custom_call.1} parent=35 // pred_region
          %217 = dma.done %s209, 128
        $region40: #{tpu_custom_call.1} parent=35 // pred_fallthru
          _
        // Predicated region
        $region41: #{tpu_custom_call.1} parent=35 // pred_check
          %p218 = pneg %p64
        $region42: #{tpu_custom_call.1} parent=35 // pred_check_branch
          %220 = sbr.rel (%p218) target = $region44
        $region43: #{tpu_custom_call.1} parent=35 // pred_region
          %222 = dma.done [#allocation6], 12288
        $region44: #{tpu_custom_call.1} parent=35 // pred_fallthru
          _
        // Predicated region
        $region45: #{tpu_custom_call.1} parent=35 // pred_check
          %p223 = pneg %p85
        $region46: #{tpu_custom_call.1} parent=35 // pred_check_branch
          %225 = sbr.rel (%p223) target = $region48
        $region47: #{tpu_custom_call.1} parent=35 // pred_region
          %227 = dma.done [#allocation6], 4096
        $region48: #{tpu_custom_call.1} parent=35 // pred_fallthru
          _
        %s228 = sand.u32 %s30, 1
        %s229 = scalar_lea.sflag [#allocation3], %s228
        %s230 = sand.u32 %s30, 1
        %s231 = smul.addr %s230, 8
        %s232 = scalar_lea.vmem [#allocation2], %s231
        %p233 = pneg %p43
        %p234 = pneg %p40
        %p235 = pneg %p64
        %p236 = pneg %p61
        %p237 = pneg %p85
        %p238 = pneg %p82
        %p239 = pneg %p106
        %p240 = pneg %p103
        %p241 = pneg %p132
        %p242 = pneg %p129
        %s243 = sand.u32 %s119, 1
        %s244 = scalar_lea.sflag [#allocation4], %s243
        %s245 = sand.u32 %s119, 1
        %s246 = smul.addr %s245, 8
        %s247 = scalar_lea.vmem [#allocation8], %s246
        %v248 = vld [vmem:[%s212] sm:$0xff]
        %v249 = vld [vmem:[#allocation5] sm:$0xff]
        %v250 = vld [vmem:[#allocation5 + $0x8] sm:$0xff]
        %v251 = vld [vmem:[#allocation5 + $0x10] sm:$0xff]
        %v252 = vld [vmem:[#allocation5 + $0x18] sm:$0xff]
        %v253 = vld [vmem:[#allocation5 + $0x20] sm:$0xff]
        %v254 = vld [vmem:[#allocation5 + $0x28] sm:$0xff]
        %v255 = vld [vmem:[#allocation5 + $0x30] sm:$0xff]
        %v256 = vld [vmem:[#allocation5 + $0x38] sm:$0xff]
        %v257 = vld [vmem:[#allocation5 + $0x40] sm:$0xff]
        %v258 = vld [vmem:[#allocation5 + $0x48] sm:$0xff]
        %v259 = vld [vmem:[#allocation5 + $0x50] sm:$0xff]
        %v260 = vld [vmem:[#allocation5 + $0x58] sm:$0xff]
        %v261 = vld [vmem:[#allocation5 + $0x60] sm:$0xff]
        %v262 = vld [vmem:[#allocation5 + $0x68] sm:$0xff]
        %v263 = vld [vmem:[#allocation5 + $0x70] sm:$0xff]
        %v264 = vld [vmem:[#allocation5 + $0x78] sm:$0xff]
        %v265 = vld [vmem:[#allocation5 + $0x80] sm:$0xff]
        %v266 = vld [vmem:[#allocation5 + $0x88] sm:$0xff]
        %v267 = vld [vmem:[#allocation5 + $0x90] sm:$0xff]
        %v268 = vld [vmem:[#allocation5 + $0x98] sm:$0xff]
        %v269 = vld [vmem:[#allocation5 + $0xa0] sm:$0xff]
        %v270 = vld [vmem:[#allocation5 + $0xa8] sm:$0xff]
        %v271 = vld [vmem:[#allocation5 + $0xb0] sm:$0xff]
        %v272 = vld [vmem:[#allocation5 + $0xb8] sm:$0xff]
        %v273 = vld [vmem:[#allocation5 + $0xc0] sm:$0xff]
        %v274 = vld [vmem:[#allocation5 + $0xc8] sm:$0xff]
        %v275 = vld [vmem:[#allocation5 + $0xd0] sm:$0xff]
        %v276 = vld [vmem:[#allocation5 + $0xd8] sm:$0xff]
        %v277 = vld [vmem:[#allocation5 + $0xe0] sm:$0xff]
        %v278 = vld [vmem:[#allocation5 + $0xe8] sm:$0xff]
        %v279 = vld [vmem:[#allocation5 + $0xf0] sm:$0xff]
        %v280 = vld [vmem:[#allocation5 + $0xf8] sm:$0xff]
        %v281 = vld [vmem:[#allocation5 + $0x100] sm:$0xff]
        %v282 = vld [vmem:[#allocation5 + $0x108] sm:$0xff]
        %v283 = vld [vmem:[#allocation5 + $0x110] sm:$0xff]
        %v284 = vld [vmem:[#allocation5 + $0x118] sm:$0xff]
        %v285 = vld [vmem:[#allocation5 + $0x120] sm:$0xff]
        %v286 = vld [vmem:[#allocation5 + $0x128] sm:$0xff]
        %v287 = vld [vmem:[#allocation5 + $0x130] sm:$0xff]
        %v288 = vld [vmem:[#allocation5 + $0x138] sm:$0xff]
        %v289 = vld [vmem:[#allocation5 + $0x140] sm:$0xff]
        %v290 = vld [vmem:[#allocation5 + $0x148] sm:$0xff]
        %v291 = vld [vmem:[#allocation5 + $0x150] sm:$0xff]
        %v292 = vld [vmem:[#allocation5 + $0x158] sm:$0xff]
        %v293 = vld [vmem:[#allocation5 + $0x160] sm:$0xff]
        %v294 = vld [vmem:[#allocation5 + $0x168] sm:$0xff]
        %v295 = vld [vmem:[#allocation5 + $0x170] sm:$0xff]
        %v296 = vld [vmem:[#allocation5 + $0x178] sm:$0xff]
        %v297 = vld [vmem:[#allocation5 + $0x180] sm:$0xff]
        %v298 = vld [vmem:[#allocation5 + $0x188] sm:$0xff]
        %v299 = vld [vmem:[#allocation5 + $0x190] sm:$0xff]
        %v300 = vld [vmem:[#allocation5 + $0x198] sm:$0xff]
        %v301 = vld [vmem:[#allocation5 + $0x1a0] sm:$0xff]
        %v302 = vld [vmem:[#allocation5 + $0x1a8] sm:$0xff]
        %v303 = vld [vmem:[#allocation5 + $0x1b0] sm:$0xff]
        %v304 = vld [vmem:[#allocation5 + $0x1b8] sm:$0xff]
        %v305 = vld [vmem:[#allocation5 + $0x1c0] sm:$0xff]
        %v306 = vld [vmem:[#allocation5 + $0x1c8] sm:$0xff]
        %v307 = vld [vmem:[#allocation5 + $0x1d0] sm:$0xff]
        %v308 = vld [vmem:[#allocation5 + $0x1d8] sm:$0xff]
        %v309 = vld [vmem:[#allocation5 + $0x1e0] sm:$0xff]
        %v310 = vld [vmem:[#allocation5 + $0x1e8] sm:$0xff]
        %v311 = vld [vmem:[#allocation5 + $0x1f0] sm:$0xff]
        %v312 = vld [vmem:[#allocation5 + $0x1f8] sm:$0xff]
        %v313 = vld [vmem:[#allocation5 + $0x200] sm:$0xff]
        %v314 = vld [vmem:[#allocation5 + $0x208] sm:$0xff]
        %v315 = vld [vmem:[#allocation5 + $0x210] sm:$0xff]
        %v316 = vld [vmem:[#allocation5 + $0x218] sm:$0xff]
        %v317 = vld [vmem:[#allocation5 + $0x220] sm:$0xff]
        %v318 = vld [vmem:[#allocation5 + $0x228] sm:$0xff]
        %v319 = vld [vmem:[#allocation5 + $0x230] sm:$0xff]
        %v320 = vld [vmem:[#allocation5 + $0x238] sm:$0xff]
        %v321 = vld [vmem:[#allocation5 + $0x240] sm:$0xff]
        %v322 = vld [vmem:[#allocation5 + $0x248] sm:$0xff]
        %v323 = vld [vmem:[#allocation5 + $0x250] sm:$0xff]
        %v324 = vld [vmem:[#allocation5 + $0x258] sm:$0xff]
        %v325 = vld [vmem:[#allocation5 + $0x260] sm:$0xff]
        %v326 = vld [vmem:[#allocation5 + $0x268] sm:$0xff]
        %v327 = vld [vmem:[#allocation5 + $0x270] sm:$0xff]
        %v328 = vld [vmem:[#allocation5 + $0x278] sm:$0xff]
        %v329 = vld [vmem:[#allocation5 + $0x280] sm:$0xff]
        %v330 = vld [vmem:[#allocation5 + $0x288] sm:$0xff]
        %v331 = vld [vmem:[#allocation5 + $0x290] sm:$0xff]
        %v332 = vld [vmem:[#allocation5 + $0x298] sm:$0xff]
        %v333 = vld [vmem:[#allocation5 + $0x2a0] sm:$0xff]
        %v334 = vld [vmem:[#allocation5 + $0x2a8] sm:$0xff]
        %v335 = vld [vmem:[#allocation5 + $0x2b0] sm:$0xff]
        %v336 = vld [vmem:[#allocation5 + $0x2b8] sm:$0xff]
        %v337 = vld [vmem:[#allocation5 + $0x2c0] sm:$0xff]
        %v338 = vld [vmem:[#allocation5 + $0x2c8] sm:$0xff]
        %v339 = vld [vmem:[#allocation5 + $0x2d0] sm:$0xff]
        %v340 = vld [vmem:[#allocation5 + $0x2d8] sm:$0xff]
        %v341 = vld [vmem:[#allocation5 + $0x2e0] sm:$0xff]
        %v342 = vld [vmem:[#allocation5 + $0x2e8] sm:$0xff]
        %v343 = vld [vmem:[#allocation5 + $0x2f0] sm:$0xff]
        %v344 = vld [vmem:[#allocation5 + $0x2f8] sm:$0xff]
        %vm345 = vcmask 261120
        %v347 = vsel %vm345, %v248, 0
        %349 = vmatpush.msra.mxu0 0.0
        %350 = vmatpush.msra.mxu0 0.0
        %351 = vmatpush.msra.mxu0 0.0
        %352 = vmatpush.msra.mxu0 0.0
        %353 = vmatpush.msra.mxu0 0.0
        %354 = vmatpush.msra.mxu0 0.0
        %355 = vmatpush.msra.mxu0 0.0
        %356 = vmatpush.msra.mxu0 0.0
        %357 = vmatpush.msra.mxu0 0.0
        %358 = vmatpush.msra.mxu0 0.0
        %359 = vmatpush.msra.mxu0 0.0
        %360 = vmatpush.msra.mxu0 0.0
        %361 = vmatpush.msra.mxu0 %v252
        %362 = vmatpush.msra.mxu0 %v251
        %363 = vmatpush.msra.mxu0 %v250
        %364 = vmatpush.msra.mxu0 %v249
        %365 = vmatmul.f32.gmra.mxu0 %v347
        %v366 = vpop.f32.mrf.mxu0
        %v367 = vadd.f32 0.0, %v366
        %368 = vdwg.mxu0
        %369 = vmatpush.msra.mxu0 0.0
        %370 = vmatpush.msra.mxu0 0.0
        %371 = vmatpush.msra.mxu0 0.0
        %372 = vmatpush.msra.mxu0 0.0
        %373 = vmatpush.msra.mxu0 0.0
        %374 = vmatpush.msra.mxu0 0.0
        %375 = vmatpush.msra.mxu0 0.0
        %376 = vmatpush.msra.mxu0 0.0
        %377 = vmatpush.msra.mxu0 0.0
        %378 = vmatpush.msra.mxu0 0.0
        %379 = vmatpush.msra.mxu0 0.0
        %380 = vmatpush.msra.mxu0 0.0
        %381 = vmatpush.msra.mxu0 %v256
        %382 = vmatpush.msra.mxu0 %v255
        %383 = vmatpush.msra.mxu0 %v254
        %384 = vmatpush.msra.mxu0 %v253
        %385 = vmatmul.f32.gmra.mxu0 %v347
        %v386 = vpop.f32.mrf.mxu0
        %v387 = vadd.f32 0.0, %v386
        %388 = vdwg.mxu0
        %389 = vmatpush.msra.mxu0 0.0
        %390 = vmatpush.msra.mxu0 0.0
        %391 = vmatpush.msra.mxu0 0.0
        %392 = vmatpush.msra.mxu0 0.0
        %393 = vmatpush.msra.mxu0 0.0
        %394 = vmatpush.msra.mxu0 0.0
        %395 = vmatpush.msra.mxu0 0.0
        %396 = vmatpush.msra.mxu0 0.0
        %397 = vmatpush.msra.mxu0 0.0
        %398 = vmatpush.msra.mxu0 0.0
        %399 = vmatpush.msra.mxu0 0.0
        %400 = vmatpush.msra.mxu0 0.0
        %401 = vmatpush.msra.mxu0 %v260
        %402 = vmatpush.msra.mxu0 %v259
        %403 = vmatpush.msra.mxu0 %v258
        %404 = vmatpush.msra.mxu0 %v257
        %405 = vmatmul.f32.gmra.mxu0 %v347
        %v406 = vpop.f32.mrf.mxu0
        %v407 = vadd.f32 0.0, %v406
        %408 = vdwg.mxu0
        %409 = vmatpush.msra.mxu0 0.0
        %410 = vmatpush.msra.mxu0 0.0
        %411 = vmatpush.msra.mxu0 0.0
        %412 = vmatpush.msra.mxu0 0.0
        %413 = vmatpush.msra.mxu0 0.0
        %414 = vmatpush.msra.mxu0 0.0
        %415 = vmatpush.msra.mxu0 0.0
        %416 = vmatpush.msra.mxu0 0.0
        %417 = vmatpush.msra.mxu0 0.0
        %418 = vmatpush.msra.mxu0 0.0
        %419 = vmatpush.msra.mxu0 0.0
        %420 = vmatpush.msra.mxu0 0.0
        %421 = vmatpush.msra.mxu0 %v264
        %422 = vmatpush.msra.mxu0 %v263
        %423 = vmatpush.msra.mxu0 %v262
        %424 = vmatpush.msra.mxu0 %v261
        %425 = vmatmul.f32.gmra.mxu0 %v347
        %v426 = vpop.f32.mrf.mxu0
        %v427 = vadd.f32 0.0, %v426
        %428 = vdwg.mxu0
        %429 = vmatpush.msra.mxu0 0.0
        %430 = vmatpush.msra.mxu0 0.0
        %431 = vmatpush.msra.mxu0 0.0
        %432 = vmatpush.msra.mxu0 0.0
        %433 = vmatpush.msra.mxu0 0.0
        %434 = vmatpush.msra.mxu0 0.0
        %435 = vmatpush.msra.mxu0 0.0
        %436 = vmatpush.msra.mxu0 0.0
        %437 = vmatpush.msra.mxu0 0.0
        %438 = vmatpush.msra.mxu0 0.0
        %439 = vmatpush.msra.mxu0 0.0
        %440 = vmatpush.msra.mxu0 0.0
        %441 = vmatpush.msra.mxu0 %v268
        %442 = vmatpush.msra.mxu0 %v267
        %443 = vmatpush.msra.mxu0 %v266
        %444 = vmatpush.msra.mxu0 %v265
        %445 = vmatmul.f32.gmra.mxu0 %v347
        %v446 = vpop.f32.mrf.mxu0
        %v447 = vadd.f32 0.0, %v446
        %448 = vdwg.mxu0
        %449 = vmatpush.msra.mxu0 0.0
        %450 = vmatpush.msra.mxu0 0.0
        %451 = vmatpush.msra.mxu0 0.0
        %452 = vmatpush.msra.mxu0 0.0
        %453 = vmatpush.msra.mxu0 0.0
        %454 = vmatpush.msra.mxu0 0.0
        %455 = vmatpush.msra.mxu0 0.0
        %456 = vmatpush.msra.mxu0 0.0
        %457 = vmatpush.msra.mxu0 0.0
        %458 = vmatpush.msra.mxu0 0.0
        %459 = vmatpush.msra.mxu0 0.0
        %460 = vmatpush.msra.mxu0 0.0
        %461 = vmatpush.msra.mxu0 %v272
        %462 = vmatpush.msra.mxu0 %v271
        %463 = vmatpush.msra.mxu0 %v270
        %464 = vmatpush.msra.mxu0 %v269
        %465 = vmatmul.f32.gmra.mxu0 %v347
        %v466 = vpop.f32.mrf.mxu0
        %v467 = vadd.f32 0.0, %v466
        %468 = vdwg.mxu0
        %469 = vmatpush.msra.mxu0 0.0
        %470 = vmatpush.msra.mxu0 0.0
        %471 = vmatpush.msra.mxu0 0.0
        %472 = vmatpush.msra.mxu0 0.0
        %473 = vmatpush.msra.mxu0 0.0
        %474 = vmatpush.msra.mxu0 0.0
        %475 = vmatpush.msra.mxu0 0.0
        %476 = vmatpush.msra.mxu0 0.0
        %477 = vmatpush.msra.mxu0 0.0
        %478 = vmatpush.msra.mxu0 0.0
        %479 = vmatpush.msra.mxu0 0.0
        %480 = vmatpush.msra.mxu0 0.0
        %481 = vmatpush.msra.mxu0 %v276
        %482 = vmatpush.msra.mxu0 %v275
        %483 = vmatpush.msra.mxu0 %v274
        %484 = vmatpush.msra.mxu0 %v273
        %485 = vmatmul.f32.gmra.mxu0 %v347
        %v486 = vpop.f32.mrf.mxu0
        %v487 = vadd.f32 0.0, %v486
        %488 = vdwg.mxu0
        %489 = vmatpush.msra.mxu0 0.0
        %490 = vmatpush.msra.mxu0 0.0
        %491 = vmatpush.msra.mxu0 0.0
        %492 = vmatpush.msra.mxu0 0.0
        %493 = vmatpush.msra.mxu0 0.0
        %494 = vmatpush.msra.mxu0 0.0
        %495 = vmatpush.msra.mxu0 0.0
        %496 = vmatpush.msra.mxu0 0.0
        %497 = vmatpush.msra.mxu0 0.0
        %498 = vmatpush.msra.mxu0 0.0
        %499 = vmatpush.msra.mxu0 0.0
        %500 = vmatpush.msra.mxu0 0.0
        %501 = vmatpush.msra.mxu0 %v280
        %502 = vmatpush.msra.mxu0 %v279
        %503 = vmatpush.msra.mxu0 %v278
        %504 = vmatpush.msra.mxu0 %v277
        %505 = vmatmul.f32.gmra.mxu0 %v347
        %v506 = vpop.f32.mrf.mxu0
        %v507 = vadd.f32 0.0, %v506
        %508 = vdwg.mxu0
        %509 = vmatpush.msra.mxu0 0.0
        %510 = vmatpush.msra.mxu0 0.0
        %511 = vmatpush.msra.mxu0 0.0
        %512 = vmatpush.msra.mxu0 0.0
        %513 = vmatpush.msra.mxu0 0.0
        %514 = vmatpush.msra.mxu0 0.0
        %515 = vmatpush.msra.mxu0 0.0
        %516 = vmatpush.msra.mxu0 0.0
        %517 = vmatpush.msra.mxu0 0.0
        %518 = vmatpush.msra.mxu0 0.0
        %519 = vmatpush.msra.mxu0 0.0
        %520 = vmatpush.msra.mxu0 0.0
        %521 = vmatpush.msra.mxu0 %v284
        %522 = vmatpush.msra.mxu0 %v283
        %523 = vmatpush.msra.mxu0 %v282
        %524 = vmatpush.msra.mxu0 %v281
        %525 = vmatmul.f32.gmra.mxu0 %v347
        %v526 = vpop.f32.mrf.mxu0
        %v527 = vadd.f32 0.0, %v526
        %528 = vdwg.mxu0
        %529 = vmatpush.msra.mxu0 0.0
        %530 = vmatpush.msra.mxu0 0.0
        %531 = vmatpush.msra.mxu0 0.0
        %532 = vmatpush.msra.mxu0 0.0
        %533 = vmatpush.msra.mxu0 0.0
        %534 = vmatpush.msra.mxu0 0.0
        %535 = vmatpush.msra.mxu0 0.0
        %536 = vmatpush.msra.mxu0 0.0
        %537 = vmatpush.msra.mxu0 0.0
        %538 = vmatpush.msra.mxu0 0.0
        %539 = vmatpush.msra.mxu0 0.0
        %540 = vmatpush.msra.mxu0 0.0
        %541 = vmatpush.msra.mxu0 %v288
        %542 = vmatpush.msra.mxu0 %v287
        %543 = vmatpush.msra.mxu0 %v286
        %544 = vmatpush.msra.mxu0 %v285
        %545 = vmatmul.f32.gmra.mxu0 %v347
        %v546 = vpop.f32.mrf.mxu0
        %v547 = vadd.f32 0.0, %v546
        %548 = vdwg.mxu0
        %549 = vmatpush.msra.mxu0 0.0
        %550 = vmatpush.msra.mxu0 0.0
        %551 = vmatpush.msra.mxu0 0.0
        %552 = vmatpush.msra.mxu0 0.0
        %553 = vmatpush.msra.mxu0 0.0
        %554 = vmatpush.msra.mxu0 0.0
        %555 = vmatpush.msra.mxu0 0.0
        %556 = vmatpush.msra.mxu0 0.0
        %557 = vmatpush.msra.mxu0 0.0
        %558 = vmatpush.msra.mxu0 0.0
        %559 = vmatpush.msra.mxu0 0.0
        %560 = vmatpush.msra.mxu0 0.0
        %561 = vmatpush.msra.mxu0 %v292
        %562 = vmatpush.msra.mxu0 %v291
        %563 = vmatpush.msra.mxu0 %v290
        %564 = vmatpush.msra.mxu0 %v289
        %565 = vmatmul.f32.gmra.mxu0 %v347
        %v566 = vpop.f32.mrf.mxu0
        %v567 = vadd.f32 0.0, %v566
        %568 = vdwg.mxu0
        %569 = vmatpush.msra.mxu0 0.0
        %570 = vmatpush.msra.mxu0 0.0
        %571 = vmatpush.msra.mxu0 0.0
        %572 = vmatpush.msra.mxu0 0.0
        %573 = vmatpush.msra.mxu0 0.0
        %574 = vmatpush.msra.mxu0 0.0
        %575 = vmatpush.msra.mxu0 0.0
        %576 = vmatpush.msra.mxu0 0.0
        %577 = vmatpush.msra.mxu0 0.0
        %578 = vmatpush.msra.mxu0 0.0
        %579 = vmatpush.msra.mxu0 0.0
        %580 = vmatpush.msra.mxu0 0.0
        %581 = vmatpush.msra.mxu0 %v296
        %582 = vmatpush.msra.mxu0 %v295
        %583 = vmatpush.msra.mxu0 %v294
        %584 = vmatpush.msra.mxu0 %v293
        %585 = vmatmul.f32.gmra.mxu0 %v347
        %v586 = vpop.f32.mrf.mxu0
        %v587 = vadd.f32 0.0, %v586
        %588 = vdwg.mxu0
        %589 = vmatpush.msra.mxu0 0.0
        %590 = vmatpush.msra.mxu0 0.0
        %591 = vmatpush.msra.mxu0 0.0
        %592 = vmatpush.msra.mxu0 0.0
        %593 = vmatpush.msra.mxu0 0.0
        %594 = vmatpush.msra.mxu0 0.0
        %595 = vmatpush.msra.mxu0 0.0
        %596 = vmatpush.msra.mxu0 0.0
        %597 = vmatpush.msra.mxu0 0.0
        %598 = vmatpush.msra.mxu0 0.0
        %599 = vmatpush.msra.mxu0 0.0
        %600 = vmatpush.msra.mxu0 0.0
        %601 = vmatpush.msra.mxu0 %v300
        %602 = vmatpush.msra.mxu0 %v299
        %603 = vmatpush.msra.mxu0 %v298
        %604 = vmatpush.msra.mxu0 %v297
        %605 = vmatmul.f32.gmra.mxu0 %v347
        %v606 = vpop.f32.mrf.mxu0
        %v607 = vadd.f32 0.0, %v606
        %608 = vdwg.mxu0
        %609 = vmatpush.msra.mxu0 0.0
        %610 = vmatpush.msra.mxu0 0.0
        %611 = vmatpush.msra.mxu0 0.0
        %612 = vmatpush.msra.mxu0 0.0
        %613 = vmatpush.msra.mxu0 0.0
        %614 = vmatpush.msra.mxu0 0.0
        %615 = vmatpush.msra.mxu0 0.0
        %616 = vmatpush.msra.mxu0 0.0
        %617 = vmatpush.msra.mxu0 0.0
        %618 = vmatpush.msra.mxu0 0.0
        %619 = vmatpush.msra.mxu0 0.0
        %620 = vmatpush.msra.mxu0 0.0
        %621 = vmatpush.msra.mxu0 %v304
        %622 = vmatpush.msra.mxu0 %v303
        %623 = vmatpush.msra.mxu0 %v302
        %624 = vmatpush.msra.mxu0 %v301
        %625 = vmatmul.f32.gmra.mxu0 %v347
        %v626 = vpop.f32.mrf.mxu0
        %v627 = vadd.f32 0.0, %v626
        %628 = vdwg.mxu0
        %629 = vmatpush.msra.mxu0 0.0
        %630 = vmatpush.msra.mxu0 0.0
        %631 = vmatpush.msra.mxu0 0.0
        %632 = vmatpush.msra.mxu0 0.0
        %633 = vmatpush.msra.mxu0 0.0
        %634 = vmatpush.msra.mxu0 0.0
        %635 = vmatpush.msra.mxu0 0.0
        %636 = vmatpush.msra.mxu0 0.0
        %637 = vmatpush.msra.mxu0 0.0
        %638 = vmatpush.msra.mxu0 0.0
        %639 = vmatpush.msra.mxu0 0.0
        %640 = vmatpush.msra.mxu0 0.0
        %641 = vmatpush.msra.mxu0 %v308
        %642 = vmatpush.msra.mxu0 %v307
        %643 = vmatpush.msra.mxu0 %v306
        %644 = vmatpush.msra.mxu0 %v305
        %645 = vmatmul.f32.gmra.mxu0 %v347
        %v646 = vpop.f32.mrf.mxu0
        %v647 = vadd.f32 0.0, %v646
        %648 = vdwg.mxu0
        %649 = vmatpush.msra.mxu0 0.0
        %650 = vmatpush.msra.mxu0 0.0
        %651 = vmatpush.msra.mxu0 0.0
        %652 = vmatpush.msra.mxu0 0.0
        %653 = vmatpush.msra.mxu0 0.0
        %654 = vmatpush.msra.mxu0 0.0
        %655 = vmatpush.msra.mxu0 0.0
        %656 = vmatpush.msra.mxu0 0.0
        %657 = vmatpush.msra.mxu0 0.0
        %658 = vmatpush.msra.mxu0 0.0
        %659 = vmatpush.msra.mxu0 0.0
        %660 = vmatpush.msra.mxu0 0.0
        %661 = vmatpush.msra.mxu0 %v312
        %662 = vmatpush.msra.mxu0 %v311
        %663 = vmatpush.msra.mxu0 %v310
        %664 = vmatpush.msra.mxu0 %v309
        %665 = vmatmul.f32.gmra.mxu0 %v347
        %v666 = vpop.f32.mrf.mxu0
        %v667 = vadd.f32 0.0, %v666
        %668 = vdwg.mxu0
        %669 = vmatpush.msra.mxu0 0.0
        %670 = vmatpush.msra.mxu0 0.0
        %671 = vmatpush.msra.mxu0 0.0
        %672 = vmatpush.msra.mxu0 0.0
        %673 = vmatpush.msra.mxu0 0.0
        %674 = vmatpush.msra.mxu0 0.0
        %675 = vmatpush.msra.mxu0 0.0
        %676 = vmatpush.msra.mxu0 0.0
        %677 = vmatpush.msra.mxu0 0.0
        %678 = vmatpush.msra.mxu0 0.0
        %679 = vmatpush.msra.mxu0 0.0
        %680 = vmatpush.msra.mxu0 0.0
        %681 = vmatpush.msra.mxu0 %v316
        %682 = vmatpush.msra.mxu0 %v315
        %683 = vmatpush.msra.mxu0 %v314
        %684 = vmatpush.msra.mxu0 %v313
        %685 = vmatmul.f32.gmra.mxu0 %v347
        %v686 = vpop.f32.mrf.mxu0
        %v687 = vadd.f32 0.0, %v686
        %688 = vdwg.mxu0
        %689 = vmatpush.msra.mxu0 0.0
        %690 = vmatpush.msra.mxu0 0.0
        %691 = vmatpush.msra.mxu0 0.0
        %692 = vmatpush.msra.mxu0 0.0
        %693 = vmatpush.msra.mxu0 0.0
        %694 = vmatpush.msra.mxu0 0.0
        %695 = vmatpush.msra.mxu0 0.0
        %696 = vmatpush.msra.mxu0 0.0
        %697 = vmatpush.msra.mxu0 0.0
        %698 = vmatpush.msra.mxu0 0.0
        %699 = vmatpush.msra.mxu0 0.0
        %700 = vmatpush.msra.mxu0 0.0
        %701 = vmatpush.msra.mxu0 %v320
        %702 = vmatpush.msra.mxu0 %v319
        %703 = vmatpush.msra.mxu0 %v318
        %704 = vmatpush.msra.mxu0 %v317
        %705 = vmatmul.f32.gmra.mxu0 %v347
        %v706 = vpop.f32.mrf.mxu0
        %v707 = vadd.f32 0.0, %v706
        %708 = vdwg.mxu0
        %709 = vmatpush.msra.mxu0 0.0
        %710 = vmatpush.msra.mxu0 0.0
        %711 = vmatpush.msra.mxu0 0.0
        %712 = vmatpush.msra.mxu0 0.0
        %713 = vmatpush.msra.mxu0 0.0
        %714 = vmatpush.msra.mxu0 0.0
        %715 = vmatpush.msra.mxu0 0.0
        %716 = vmatpush.msra.mxu0 0.0
        %717 = vmatpush.msra.mxu0 0.0
        %718 = vmatpush.msra.mxu0 0.0
        %719 = vmatpush.msra.mxu0 0.0
        %720 = vmatpush.msra.mxu0 0.0
        %721 = vmatpush.msra.mxu0 %v324
        %722 = vmatpush.msra.mxu0 %v323
        %723 = vmatpush.msra.mxu0 %v322
        %724 = vmatpush.msra.mxu0 %v321
        %725 = vmatmul.f32.gmra.mxu0 %v347
        %v726 = vpop.f32.mrf.mxu0
        %v727 = vadd.f32 0.0, %v726
        %728 = vdwg.mxu0
        %729 = vmatpush.msra.mxu0 0.0
        %730 = vmatpush.msra.mxu0 0.0
        %731 = vmatpush.msra.mxu0 0.0
        %732 = vmatpush.msra.mxu0 0.0
        %733 = vmatpush.msra.mxu0 0.0
        %734 = vmatpush.msra.mxu0 0.0
        %735 = vmatpush.msra.mxu0 0.0
        %736 = vmatpush.msra.mxu0 0.0
        %737 = vmatpush.msra.mxu0 0.0
        %738 = vmatpush.msra.mxu0 0.0
        %739 = vmatpush.msra.mxu0 0.0
        %740 = vmatpush.msra.mxu0 0.0
        %741 = vmatpush.msra.mxu0 %v328
        %742 = vmatpush.msra.mxu0 %v327
        %743 = vmatpush.msra.mxu0 %v326
        %744 = vmatpush.msra.mxu0 %v325
        %745 = vmatmul.f32.gmra.mxu0 %v347
        %v746 = vpop.f32.mrf.mxu0
        %v747 = vadd.f32 0.0, %v746
        %748 = vdwg.mxu0
        %749 = vmatpush.msra.mxu0 0.0
        %750 = vmatpush.msra.mxu0 0.0
        %751 = vmatpush.msra.mxu0 0.0
        %752 = vmatpush.msra.mxu0 0.0
        %753 = vmatpush.msra.mxu0 0.0
        %754 = vmatpush.msra.mxu0 0.0
        %755 = vmatpush.msra.mxu0 0.0
        %756 = vmatpush.msra.mxu0 0.0
        %757 = vmatpush.msra.mxu0 0.0
        %758 = vmatpush.msra.mxu0 0.0
        %759 = vmatpush.msra.mxu0 0.0
        %760 = vmatpush.msra.mxu0 0.0
        %761 = vmatpush.msra.mxu0 %v332
        %762 = vmatpush.msra.mxu0 %v331
        %763 = vmatpush.msra.mxu0 %v330
        %764 = vmatpush.msra.mxu0 %v329
        %765 = vmatmul.f32.gmra.mxu0 %v347
        %v766 = vpop.f32.mrf.mxu0
        %v767 = vadd.f32 0.0, %v766
        %768 = vdwg.mxu0
        %769 = vmatpush.msra.mxu0 0.0
        %770 = vmatpush.msra.mxu0 0.0
        %771 = vmatpush.msra.mxu0 0.0
        %772 = vmatpush.msra.mxu0 0.0
        %773 = vmatpush.msra.mxu0 0.0
        %774 = vmatpush.msra.mxu0 0.0
        %775 = vmatpush.msra.mxu0 0.0
        %776 = vmatpush.msra.mxu0 0.0
        %777 = vmatpush.msra.mxu0 0.0
        %778 = vmatpush.msra.mxu0 0.0
        %779 = vmatpush.msra.mxu0 0.0
        %780 = vmatpush.msra.mxu0 0.0
        %781 = vmatpush.msra.mxu0 %v336
        %782 = vmatpush.msra.mxu0 %v335
        %783 = vmatpush.msra.mxu0 %v334
        %784 = vmatpush.msra.mxu0 %v333
        %785 = vmatmul.f32.gmra.mxu0 %v347
        %v786 = vpop.f32.mrf.mxu0
        %v787 = vadd.f32 0.0, %v786
        %788 = vdwg.mxu0
        %789 = vmatpush.msra.mxu0 0.0
        %790 = vmatpush.msra.mxu0 0.0
        %791 = vmatpush.msra.mxu0 0.0
        %792 = vmatpush.msra.mxu0 0.0
        %793 = vmatpush.msra.mxu0 0.0
        %794 = vmatpush.msra.mxu0 0.0
        %795 = vmatpush.msra.mxu0 0.0
        %796 = vmatpush.msra.mxu0 0.0
        %797 = vmatpush.msra.mxu0 0.0
        %798 = vmatpush.msra.mxu0 0.0
        %799 = vmatpush.msra.mxu0 0.0
        %800 = vmatpush.msra.mxu0 0.0
        %801 = vmatpush.msra.mxu0 %v340
        %802 = vmatpush.msra.mxu0 %v339
        %803 = vmatpush.msra.mxu0 %v338
        %804 = vmatpush.msra.mxu0 %v337
        %805 = vmatmul.f32.gmra.mxu0 %v347
        %v806 = vpop.f32.mrf.mxu0
        %v807 = vadd.f32 0.0, %v806
        %808 = vdwg.mxu0
        %809 = vmatpush.msra.mxu0 0.0
        %810 = vmatpush.msra.mxu0 0.0
        %811 = vmatpush.msra.mxu0 0.0
        %812 = vmatpush.msra.mxu0 0.0
        %813 = vmatpush.msra.mxu0 0.0
        %814 = vmatpush.msra.mxu0 0.0
        %815 = vmatpush.msra.mxu0 0.0
        %816 = vmatpush.msra.mxu0 0.0
        %817 = vmatpush.msra.mxu0 0.0
        %818 = vmatpush.msra.mxu0 0.0
        %819 = vmatpush.msra.mxu0 0.0
        %820 = vmatpush.msra.mxu0 0.0
        %821 = vmatpush.msra.mxu0 %v344
        %822 = vmatpush.msra.mxu0 %v343
        %823 = vmatpush.msra.mxu0 %v342
        %824 = vmatpush.msra.mxu0 %v341
        %825 = vmatmul.f32.gmra.mxu0 %v347
        %v826 = vpop.f32.mrf.mxu0
        %v827 = vadd.f32 0.0, %v826
        %828 = vdwg.mxu0
        %v830 = vsel %vm345, %v367, 0
        %v833 = vsel %vm345, %v527, 0
        %835 = vmatpush.xpose.msra.mxu0 0.0
        %836 = vmatpush.xpose.msra.mxu0 0.0
        %837 = vmatpush.xpose.msra.mxu0 0.0
        %838 = vmatpush.xpose.msra.mxu0 0.0
        %839 = vmatpush.xpose.msra.mxu0 0.0
        %840 = vmatpush.xpose.msra.mxu0 0.0
        %841 = vmatpush.xpose.msra.mxu0 0.0
        %842 = vmatpush.xpose.msra.mxu0 0.0
        %843 = vmatpush.xpose.msra.mxu0 0.0
        %844 = vmatpush.xpose.msra.mxu0 0.0
        %845 = vmatpush.xpose.msra.mxu0 0.0
        %846 = vmatpush.xpose.msra.mxu0 0.0
        %847 = vmatpush.xpose.msra.mxu0 0.0
        %848 = vmatpush.xpose.msra.mxu0 0.0
        %849 = vmatpush.xpose.msra.mxu0 0.0
        %850 = vmatpush.xpose.msra.mxu0 %v833
        %851 = vmatmul.f32.gmra.mxu0 %v830
        %v852 = vpop.f32.mrf.mxu0
        %v853 = vadd.f32 0.0, %v852
        %854 = vdwg.mxu0
        %v856 = vsel %vm345, %v387, 0
        %v859 = vsel %vm345, %v547, 0
        %861 = vmatpush.xpose.msra.mxu0 0.0
        %862 = vmatpush.xpose.msra.mxu0 0.0
        %863 = vmatpush.xpose.msra.mxu0 0.0
        %864 = vmatpush.xpose.msra.mxu0 0.0
        %865 = vmatpush.xpose.msra.mxu0 0.0
        %866 = vmatpush.xpose.msra.mxu0 0.0
        %867 = vmatpush.xpose.msra.mxu0 0.0
        %868 = vmatpush.xpose.msra.mxu0 0.0
        %869 = vmatpush.xpose.msra.mxu0 0.0
        %870 = vmatpush.xpose.msra.mxu0 0.0
        %871 = vmatpush.xpose.msra.mxu0 0.0
        %872 = vmatpush.xpose.msra.mxu0 0.0
        %873 = vmatpush.xpose.msra.mxu0 0.0
        %874 = vmatpush.xpose.msra.mxu0 0.0
        %875 = vmatpush.xpose.msra.mxu0 0.0
        %876 = vmatpush.xpose.msra.mxu0 %v859
        %877 = vmatmul.f32.gmra.mxu0 %v856
        %v878 = vpop.f32.mrf.mxu0
        %v879 = vadd.f32 0.0, %v878
        %880 = vdwg.mxu0
        %v882 = vsel %vm345, %v407, 0
        %v885 = vsel %vm345, %v567, 0
        %887 = vmatpush.xpose.msra.mxu0 0.0
        %888 = vmatpush.xpose.msra.mxu0 0.0
        %889 = vmatpush.xpose.msra.mxu0 0.0
        %890 = vmatpush.xpose.msra.mxu0 0.0
        %891 = vmatpush.xpose.msra.mxu0 0.0
        %892 = vmatpush.xpose.msra.mxu0 0.0
        %893 = vmatpush.xpose.msra.mxu0 0.0
        %894 = vmatpush.xpose.msra.mxu0 0.0
        %895 = vmatpush.xpose.msra.mxu0 0.0
        %896 = vmatpush.xpose.msra.mxu0 0.0
        %897 = vmatpush.xpose.msra.mxu0 0.0
        %898 = vmatpush.xpose.msra.mxu0 0.0
        %899 = vmatpush.xpose.msra.mxu0 0.0
        %900 = vmatpush.xpose.msra.mxu0 0.0
        %901 = vmatpush.xpose.msra.mxu0 0.0
        %902 = vmatpush.xpose.msra.mxu0 %v885
        %903 = vmatmul.f32.gmra.mxu0 %v882
        %v904 = vpop.f32.mrf.mxu0
        %v905 = vadd.f32 0.0, %v904
        %906 = vdwg.mxu0
        %v908 = vsel %vm345, %v427, 0
        %v911 = vsel %vm345, %v587, 0
        %913 = vmatpush.xpose.msra.mxu0 0.0
        %914 = vmatpush.xpose.msra.mxu0 0.0
        %915 = vmatpush.xpose.msra.mxu0 0.0
        %916 = vmatpush.xpose.msra.mxu0 0.0
        %917 = vmatpush.xpose.msra.mxu0 0.0
        %918 = vmatpush.xpose.msra.mxu0 0.0
        %919 = vmatpush.xpose.msra.mxu0 0.0
        %920 = vmatpush.xpose.msra.mxu0 0.0
        %921 = vmatpush.xpose.msra.mxu0 0.0
        %922 = vmatpush.xpose.msra.mxu0 0.0
        %923 = vmatpush.xpose.msra.mxu0 0.0
        %924 = vmatpush.xpose.msra.mxu0 0.0
        %925 = vmatpush.xpose.msra.mxu0 0.0
        %926 = vmatpush.xpose.msra.mxu0 0.0
        %927 = vmatpush.xpose.msra.mxu0 0.0
        %928 = vmatpush.xpose.msra.mxu0 %v911
        %929 = vmatmul.f32.gmra.mxu0 %v908
        %v930 = vpop.f32.mrf.mxu0
        %v931 = vadd.f32 0.0, %v930
        %932 = vdwg.mxu0
        %v934 = vsel %vm345, %v447, 0
        %v937 = vsel %vm345, %v607, 0
        %939 = vmatpush.xpose.msra.mxu0 0.0
        %940 = vmatpush.xpose.msra.mxu0 0.0
        %941 = vmatpush.xpose.msra.mxu0 0.0
        %942 = vmatpush.xpose.msra.mxu0 0.0
        %943 = vmatpush.xpose.msra.mxu0 0.0
        %944 = vmatpush.xpose.msra.mxu0 0.0
        %945 = vmatpush.xpose.msra.mxu0 0.0
        %946 = vmatpush.xpose.msra.mxu0 0.0
        %947 = vmatpush.xpose.msra.mxu0 0.0
        %948 = vmatpush.xpose.msra.mxu0 0.0
        %949 = vmatpush.xpose.msra.mxu0 0.0
        %950 = vmatpush.xpose.msra.mxu0 0.0
        %951 = vmatpush.xpose.msra.mxu0 0.0
        %952 = vmatpush.xpose.msra.mxu0 0.0
        %953 = vmatpush.xpose.msra.mxu0 0.0
        %954 = vmatpush.xpose.msra.mxu0 %v937
        %955 = vmatmul.f32.gmra.mxu0 %v934
        %v956 = vpop.f32.mrf.mxu0
        %v957 = vadd.f32 0.0, %v956
        %958 = vdwg.mxu0
        %v960 = vsel %vm345, %v467, 0
        %v963 = vsel %vm345, %v627, 0
        %965 = vmatpush.xpose.msra.mxu0 0.0
        %966 = vmatpush.xpose.msra.mxu0 0.0
        %967 = vmatpush.xpose.msra.mxu0 0.0
        %968 = vmatpush.xpose.msra.mxu0 0.0
        %969 = vmatpush.xpose.msra.mxu0 0.0
        %970 = vmatpush.xpose.msra.mxu0 0.0
        %971 = vmatpush.xpose.msra.mxu0 0.0
        %972 = vmatpush.xpose.msra.mxu0 0.0
        %973 = vmatpush.xpose.msra.mxu0 0.0
        %974 = vmatpush.xpose.msra.mxu0 0.0
        %975 = vmatpush.xpose.msra.mxu0 0.0
        %976 = vmatpush.xpose.msra.mxu0 0.0
        %977 = vmatpush.xpose.msra.mxu0 0.0
        %978 = vmatpush.xpose.msra.mxu0 0.0
        %979 = vmatpush.xpose.msra.mxu0 0.0
        %980 = vmatpush.xpose.msra.mxu0 %v963
        %981 = vmatmul.f32.gmra.mxu0 %v960
        %v982 = vpop.f32.mrf.mxu0
        %v983 = vadd.f32 0.0, %v982
        %984 = vdwg.mxu0
        %v986 = vsel %vm345, %v487, 0
        %v989 = vsel %vm345, %v647, 0
        %991 = vmatpush.xpose.msra.mxu0 0.0
        %992 = vmatpush.xpose.msra.mxu0 0.0
        %993 = vmatpush.xpose.msra.mxu0 0.0
        %994 = vmatpush.xpose.msra.mxu0 0.0
        %995 = vmatpush.xpose.msra.mxu0 0.0
        %996 = vmatpush.xpose.msra.mxu0 0.0
        %997 = vmatpush.xpose.msra.mxu0 0.0
        %998 = vmatpush.xpose.msra.mxu0 0.0
        %999 = vmatpush.xpose.msra.mxu0 0.0
        %1000 = vmatpush.xpose.msra.mxu0 0.0
        %1001 = vmatpush.xpose.msra.mxu0 0.0
        %1002 = vmatpush.xpose.msra.mxu0 0.0
        %1003 = vmatpush.xpose.msra.mxu0 0.0
        %1004 = vmatpush.xpose.msra.mxu0 0.0
        %1005 = vmatpush.xpose.msra.mxu0 0.0
        %1006 = vmatpush.xpose.msra.mxu0 %v989
        %1007 = vmatmul.f32.gmra.mxu0 %v986
        %v1008 = vpop.f32.mrf.mxu0
        %v1009 = vadd.f32 0.0, %v1008
        %1010 = vdwg.mxu0
        %v1012 = vsel %vm345, %v507, 0
        %v1015 = vsel %vm345, %v667, 0
        %1017 = vmatpush.xpose.msra.mxu0 0.0
        %1018 = vmatpush.xpose.msra.mxu0 0.0
        %1019 = vmatpush.xpose.msra.mxu0 0.0
        %1020 = vmatpush.xpose.msra.mxu0 0.0
        %1021 = vmatpush.xpose.msra.mxu0 0.0
        %1022 = vmatpush.xpose.msra.mxu0 0.0
        %1023 = vmatpush.xpose.msra.mxu0 0.0
        %1024 = vmatpush.xpose.msra.mxu0 0.0
        %1025 = vmatpush.xpose.msra.mxu0 0.0
        %1026 = vmatpush.xpose.msra.mxu0 0.0
        %1027 = vmatpush.xpose.msra.mxu0 0.0
        %1028 = vmatpush.xpose.msra.mxu0 0.0
        %1029 = vmatpush.xpose.msra.mxu0 0.0
        %1030 = vmatpush.xpose.msra.mxu0 0.0
        %1031 = vmatpush.xpose.msra.mxu0 0.0
        %1032 = vmatpush.xpose.msra.mxu0 %v1015
        %1033 = vmatmul.f32.gmra.mxu0 %v1012
        %v1034 = vpop.f32.mrf.mxu0
        %v1035 = vadd.f32 0.0, %v1034
        %1036 = vdwg.mxu0
        %vm1037 = vcmask 64512
        %v1038 = vsel %vm1037, %v853, -inf
        %1039 = vmax.xlane.f32.xlu0 %v1038
        %v1040 = vpop.xlane.xlu0 %1039
        %v1041 = vsel %vm1037, %v879, -inf
        %1042 = vmax.xlane.f32.xlu0 %v1041
        %v1043 = vpop.xlane.xlu0 %1042
        %v1044 = vsel %vm1037, %v905, -inf
        %1045 = vmax.xlane.f32.xlu0 %v1044
        %v1046 = vpop.xlane.xlu0 %1045
        %v1047 = vsel %vm1037, %v931, -inf
        %1048 = vmax.xlane.f32.xlu0 %v1047
        %v1049 = vpop.xlane.xlu0 %1048
        %v1050 = vsel %vm1037, %v957, -inf
        %1051 = vmax.xlane.f32.xlu0 %v1050
        %v1052 = vpop.xlane.xlu0 %1051
        %v1053 = vsel %vm1037, %v983, -inf
        %1054 = vmax.xlane.f32.xlu0 %v1053
        %v1055 = vpop.xlane.xlu0 %1054
        %v1056 = vsel %vm1037, %v1009, -inf
        %1057 = vmax.xlane.f32.xlu0 %v1056
        %v1058 = vpop.xlane.xlu0 %1057
        %v1059 = vsel %vm1037, %v1035, -inf
        %1060 = vmax.xlane.f32.xlu0 %v1059
        %v1061 = vpop.xlane.xlu0 %1060
        %v1062 = vsub.f32 %v853, %v1040
        %v1063 = vsub.f32 %v879, %v1043
        %v1064 = vsub.f32 %v905, %v1046
        %v1065 = vsub.f32 %v931, %v1049
        %v1066 = vsub.f32 %v957, %v1052
        %v1067 = vsub.f32 %v983, %v1055
        %v1068 = vsub.f32 %v1009, %v1058
        %v1069 = vsub.f32 %v1035, %v1061
        %v1070 = vmul.f32 %v1062, 1.442695
        %v1071 = vpow.pop %v1070
        %v1072 = vmul.f32 %v1063, 1.442695
        %v1073 = vpow.pop %v1072
        %v1074 = vmul.f32 %v1064, 1.442695
        %v1075 = vpow.pop %v1074
        %v1076 = vmul.f32 %v1065, 1.442695
        %v1077 = vpow.pop %v1076
        %v1078 = vmul.f32 %v1066, 1.442695
        %v1079 = vpow.pop %v1078
        %v1080 = vmul.f32 %v1067, 1.442695
        %v1081 = vpow.pop %v1080
        %v1082 = vmul.f32 %v1068, 1.442695
        %v1083 = vpow.pop %v1082
        %v1084 = vmul.f32 %v1069, 1.442695
        %v1085 = vpow.pop %v1084
        %v1086 = vsel %vm1037, %v1071, 0.0
        %1087 = vadd.xlane.f32.xlu0 %v1086
        %v1088 = vpop.xlane.xlu0 %1087
        %v1089 = vsel %vm1037, %v1073, 0.0
        %1090 = vadd.xlane.f32.xlu0 %v1089
        %v1091 = vpop.xlane.xlu0 %1090
        %v1092 = vsel %vm1037, %v1075, 0.0
        %1093 = vadd.xlane.f32.xlu0 %v1092
        %v1094 = vpop.xlane.xlu0 %1093
        %v1095 = vsel %vm1037, %v1077, 0.0
        %1096 = vadd.xlane.f32.xlu0 %v1095
        %v1097 = vpop.xlane.xlu0 %1096
        %v1098 = vsel %vm1037, %v1079, 0.0
        %1099 = vadd.xlane.f32.xlu0 %v1098
        %v1100 = vpop.xlane.xlu0 %1099
        %v1101 = vsel %vm1037, %v1081, 0.0
        %1102 = vadd.xlane.f32.xlu0 %v1101
        %v1103 = vpop.xlane.xlu0 %1102
        %v1104 = vsel %vm1037, %v1083, 0.0
        %1105 = vadd.xlane.f32.xlu0 %v1104
        %v1106 = vpop.xlane.xlu0 %1105
        %v1107 = vsel %vm1037, %v1085, 0.0
        %1108 = vadd.xlane.f32.xlu0 %v1107
        %v1109 = vpop.xlane.xlu0 %1108
        %v1110 = vrcp.pop %v1088
        %v1111 = vrcp.pop %v1091
        %v1112 = vrcp.pop %v1094
        %v1113 = vrcp.pop %v1097
        %v1114 = vrcp.pop %v1100
        %v1115 = vrcp.pop %v1103
        %v1116 = vrcp.pop %v1106
        %v1117 = vrcp.pop %v1109
        %v1118 = vmul.f32 %v1071, %v1110
        %v1119 = vmul.f32 %v1073, %v1111
        %v1120 = vmul.f32 %v1075, %v1112
        %v1121 = vmul.f32 %v1077, %v1113
        %v1122 = vmul.f32 %v1079, %v1114
        %v1123 = vmul.f32 %v1081, %v1115
        %v1124 = vmul.f32 %v1083, %v1116
        %v1125 = vmul.f32 %v1085, %v1117
        %v1127 = vsel %vm1037, %v1118, 0
        %1129 = vmatpush.msra.mxu0 0.0
        %1130 = vmatpush.msra.mxu0 0.0
        %1131 = vmatpush.msra.mxu0 0.0
        %1132 = vmatpush.msra.mxu0 0.0
        %1133 = vmatpush.msra.mxu0 0.0
        %1134 = vmatpush.msra.mxu0 0.0
        %1135 = vmatpush.msra.mxu0 0.0
        %1136 = vmatpush.msra.mxu0 0.0
        %1137 = vmatpush.msra.mxu0 0.0
        %1138 = vmatpush.msra.mxu0 0.0
        %1139 = vmatpush.msra.mxu0 0.0
        %1140 = vmatpush.msra.mxu0 0.0
        %1141 = vmatpush.msra.mxu0 0.0
        %1142 = vmatpush.msra.mxu0 0.0
        %1143 = vmatpush.msra.mxu0 0.0
        %1144 = vmatpush.msra.mxu0 %v687
        %1145 = vmatmul.f32.gmra.mxu0 %v1127
        %v1146 = vpop.f32.mrf.mxu0
        %v1147 = vadd.f32 0.0, %v1146
        %1148 = vdwg.mxu0
        %v1150 = vsel %vm1037, %v1119, 0
        %1152 = vmatpush.msra.mxu0 0.0
        %1153 = vmatpush.msra.mxu0 0.0
        %1154 = vmatpush.msra.mxu0 0.0
        %1155 = vmatpush.msra.mxu0 0.0
        %1156 = vmatpush.msra.mxu0 0.0
        %1157 = vmatpush.msra.mxu0 0.0
        %1158 = vmatpush.msra.mxu0 0.0
        %1159 = vmatpush.msra.mxu0 0.0
        %1160 = vmatpush.msra.mxu0 0.0
        %1161 = vmatpush.msra.mxu0 0.0
        %1162 = vmatpush.msra.mxu0 0.0
        %1163 = vmatpush.msra.mxu0 0.0
        %1164 = vmatpush.msra.mxu0 0.0
        %1165 = vmatpush.msra.mxu0 0.0
        %1166 = vmatpush.msra.mxu0 0.0
        %1167 = vmatpush.msra.mxu0 %v707
        %1168 = vmatmul.f32.gmra.mxu0 %v1150
        %v1169 = vpop.f32.mrf.mxu0
        %v1170 = vadd.f32 0.0, %v1169
        %1171 = vdwg.mxu0
        %v1173 = vsel %vm1037, %v1120, 0
        %1175 = vmatpush.msra.mxu0 0.0
        %1176 = vmatpush.msra.mxu0 0.0
        %1177 = vmatpush.msra.mxu0 0.0
        %1178 = vmatpush.msra.mxu0 0.0
        %1179 = vmatpush.msra.mxu0 0.0
        %1180 = vmatpush.msra.mxu0 0.0
        %1181 = vmatpush.msra.mxu0 0.0
        %1182 = vmatpush.msra.mxu0 0.0
        %1183 = vmatpush.msra.mxu0 0.0
        %1184 = vmatpush.msra.mxu0 0.0
        %1185 = vmatpush.msra.mxu0 0.0
        %1186 = vmatpush.msra.mxu0 0.0
        %1187 = vmatpush.msra.mxu0 0.0
        %1188 = vmatpush.msra.mxu0 0.0
        %1189 = vmatpush.msra.mxu0 0.0
        %1190 = vmatpush.msra.mxu0 %v727
        %1191 = vmatmul.f32.gmra.mxu0 %v1173
        %v1192 = vpop.f32.mrf.mxu0
        %v1193 = vadd.f32 0.0, %v1192
        %1194 = vdwg.mxu0
        %v1196 = vsel %vm1037, %v1121, 0
        %1198 = vmatpush.msra.mxu0 0.0
        %1199 = vmatpush.msra.mxu0 0.0
        %1200 = vmatpush.msra.mxu0 0.0
        %1201 = vmatpush.msra.mxu0 0.0
        %1202 = vmatpush.msra.mxu0 0.0
        %1203 = vmatpush.msra.mxu0 0.0
        %1204 = vmatpush.msra.mxu0 0.0
        %1205 = vmatpush.msra.mxu0 0.0
        %1206 = vmatpush.msra.mxu0 0.0
        %1207 = vmatpush.msra.mxu0 0.0
        %1208 = vmatpush.msra.mxu0 0.0
        %1209 = vmatpush.msra.mxu0 0.0
        %1210 = vmatpush.msra.mxu0 0.0
        %1211 = vmatpush.msra.mxu0 0.0
        %1212 = vmatpush.msra.mxu0 0.0
        %1213 = vmatpush.msra.mxu0 %v747
        %1214 = vmatmul.f32.gmra.mxu0 %v1196
        %v1215 = vpop.f32.mrf.mxu0
        %v1216 = vadd.f32 0.0, %v1215
        %1217 = vdwg.mxu0
        %v1219 = vsel %vm1037, %v1122, 0
        %1221 = vmatpush.msra.mxu0 0.0
        %1222 = vmatpush.msra.mxu0 0.0
        %1223 = vmatpush.msra.mxu0 0.0
        %1224 = vmatpush.msra.mxu0 0.0
        %1225 = vmatpush.msra.mxu0 0.0
        %1226 = vmatpush.msra.mxu0 0.0
        %1227 = vmatpush.msra.mxu0 0.0
        %1228 = vmatpush.msra.mxu0 0.0
        %1229 = vmatpush.msra.mxu0 0.0
        %1230 = vmatpush.msra.mxu0 0.0
        %1231 = vmatpush.msra.mxu0 0.0
        %1232 = vmatpush.msra.mxu0 0.0
        %1233 = vmatpush.msra.mxu0 0.0
        %1234 = vmatpush.msra.mxu0 0.0
        %1235 = vmatpush.msra.mxu0 0.0
        %1236 = vmatpush.msra.mxu0 %v767
        %1237 = vmatmul.f32.gmra.mxu0 %v1219
        %v1238 = vpop.f32.mrf.mxu0
        %v1239 = vadd.f32 0.0, %v1238
        %1240 = vdwg.mxu0
        %v1242 = vsel %vm1037, %v1123, 0
        %1244 = vmatpush.msra.mxu0 0.0
        %1245 = vmatpush.msra.mxu0 0.0
        %1246 = vmatpush.msra.mxu0 0.0
        %1247 = vmatpush.msra.mxu0 0.0
        %1248 = vmatpush.msra.mxu0 0.0
        %1249 = vmatpush.msra.mxu0 0.0
        %1250 = vmatpush.msra.mxu0 0.0
        %1251 = vmatpush.msra.mxu0 0.0
        %1252 = vmatpush.msra.mxu0 0.0
        %1253 = vmatpush.msra.mxu0 0.0
        %1254 = vmatpush.msra.mxu0 0.0
        %1255 = vmatpush.msra.mxu0 0.0
        %1256 = vmatpush.msra.mxu0 0.0
        %1257 = vmatpush.msra.mxu0 0.0
        %1258 = vmatpush.msra.mxu0 0.0
        %1259 = vmatpush.msra.mxu0 %v787
        %1260 = vmatmul.f32.gmra.mxu0 %v1242
        %v1261 = vpop.f32.mrf.mxu0
        %v1262 = vadd.f32 0.0, %v1261
        %1263 = vdwg.mxu0
        %v1265 = vsel %vm1037, %v1124, 0
        %1267 = vmatpush.msra.mxu0 0.0
        %1268 = vmatpush.msra.mxu0 0.0
        %1269 = vmatpush.msra.mxu0 0.0
        %1270 = vmatpush.msra.mxu0 0.0
        %1271 = vmatpush.msra.mxu0 0.0
        %1272 = vmatpush.msra.mxu0 0.0
        %1273 = vmatpush.msra.mxu0 0.0
        %1274 = vmatpush.msra.mxu0 0.0
        %1275 = vmatpush.msra.mxu0 0.0
        %1276 = vmatpush.msra.mxu0 0.0
        %1277 = vmatpush.msra.mxu0 0.0
        %1278 = vmatpush.msra.mxu0 0.0
        %1279 = vmatpush.msra.mxu0 0.0
        %1280 = vmatpush.msra.mxu0 0.0
        %1281 = vmatpush.msra.mxu0 0.0
        %1282 = vmatpush.msra.mxu0 %v807
        %1283 = vmatmul.f32.gmra.mxu0 %v1265
        %v1284 = vpop.f32.mrf.mxu0
        %v1285 = vadd.f32 0.0, %v1284
        %1286 = vdwg.mxu0
        %v1288 = vsel %vm1037, %v1125, 0
        %1290 = vmatpush.msra.mxu0 0.0
        %1291 = vmatpush.msra.mxu0 0.0
        %1292 = vmatpush.msra.mxu0 0.0
        %1293 = vmatpush.msra.mxu0 0.0
        %1294 = vmatpush.msra.mxu0 0.0
        %1295 = vmatpush.msra.mxu0 0.0
        %1296 = vmatpush.msra.mxu0 0.0
        %1297 = vmatpush.msra.mxu0 0.0
        %1298 = vmatpush.msra.mxu0 0.0
        %1299 = vmatpush.msra.mxu0 0.0
        %1300 = vmatpush.msra.mxu0 0.0
        %1301 = vmatpush.msra.mxu0 0.0
        %1302 = vmatpush.msra.mxu0 0.0
        %1303 = vmatpush.msra.mxu0 0.0
        %1304 = vmatpush.msra.mxu0 0.0
        %1305 = vmatpush.msra.mxu0 %v827
        %1306 = vmatmul.f32.gmra.mxu0 %v1288
        %v1307 = vpop.f32.mrf.mxu0
        %v1308 = vadd.f32 0.0, %v1307
        %1309 = vdwg.mxu0
        %v1310 = vld [vmem:[#allocation7] sm:$0xff]
        %v1311 = vld [vmem:[#allocation7 + $0x8] sm:$0xff]
        %v1312 = vld [vmem:[#allocation7 + $0x10] sm:$0xff]
        %v1313 = vld [vmem:[#allocation7 + $0x18] sm:$0xff]
        %v1314 = vld [vmem:[#allocation7 + $0x20] sm:$0xff]
        %v1315 = vld [vmem:[#allocation7 + $0x28] sm:$0xff]
        %v1316 = vld [vmem:[#allocation7 + $0x30] sm:$0xff]
        %v1317 = vld [vmem:[#allocation7 + $0x38] sm:$0xff]
        %v1318 = vld [vmem:[#allocation7 + $0x40] sm:$0xff]
        %v1319 = vld [vmem:[#allocation7 + $0x48] sm:$0xff]
        %v1320 = vld [vmem:[#allocation7 + $0x50] sm:$0xff]
        %v1321 = vld [vmem:[#allocation7 + $0x58] sm:$0xff]
        %v1322 = vld [vmem:[#allocation7 + $0x60] sm:$0xff]
        %v1323 = vld [vmem:[#allocation7 + $0x68] sm:$0xff]
        %v1324 = vld [vmem:[#allocation7 + $0x70] sm:$0xff]
        %v1325 = vld [vmem:[#allocation7 + $0x78] sm:$0xff]
        %v1326 = vld [vmem:[#allocation7 + $0x80] sm:$0xff]
        %v1327 = vld [vmem:[#allocation7 + $0x88] sm:$0xff]
        %v1328 = vld [vmem:[#allocation7 + $0x90] sm:$0xff]
        %v1329 = vld [vmem:[#allocation7 + $0x98] sm:$0xff]
        %v1330 = vld [vmem:[#allocation7 + $0xa0] sm:$0xff]
        %v1331 = vld [vmem:[#allocation7 + $0xa8] sm:$0xff]
        %v1332 = vld [vmem:[#allocation7 + $0xb0] sm:$0xff]
        %v1333 = vld [vmem:[#allocation7 + $0xb8] sm:$0xff]
        %v1334 = vld [vmem:[#allocation7 + $0xc0] sm:$0xff]
        %v1335 = vld [vmem:[#allocation7 + $0xc8] sm:$0xff]
        %v1336 = vld [vmem:[#allocation7 + $0xd0] sm:$0xff]
        %v1337 = vld [vmem:[#allocation7 + $0xd8] sm:$0xff]
        %v1338 = vld [vmem:[#allocation7 + $0xe0] sm:$0xff]
        %v1339 = vld [vmem:[#allocation7 + $0xe8] sm:$0xff]
        %v1340 = vld [vmem:[#allocation7 + $0xf0] sm:$0xff]
        %v1341 = vld [vmem:[#allocation7 + $0xf8] sm:$0xff]
        %v1343 = vsel %vm345, %v1147, 0
        %1345 = vmatpush.msra.mxu0 0.0
        %1346 = vmatpush.msra.mxu0 0.0
        %1347 = vmatpush.msra.mxu0 0.0
        %1348 = vmatpush.msra.mxu0 0.0
        %1349 = vmatpush.msra.mxu0 0.0
        %1350 = vmatpush.msra.mxu0 0.0
        %1351 = vmatpush.msra.mxu0 0.0
        %1352 = vmatpush.msra.mxu0 0.0
        %1353 = vmatpush.msra.mxu0 0.0
        %1354 = vmatpush.msra.mxu0 0.0
        %1355 = vmatpush.msra.mxu0 0.0
        %1356 = vmatpush.msra.mxu0 0.0
        %1357 = vmatpush.msra.mxu0 %v1313
        %1358 = vmatpush.msra.mxu0 %v1312
        %1359 = vmatpush.msra.mxu0 %v1311
        %1360 = vmatpush.msra.mxu0 %v1310
        %1361 = vmatmul.f32.gmra.mxu0 %v1343
        %v1362 = vpop.f32.mrf.mxu0
        %v1363 = vadd.f32 0.0, %v1362
        %1364 = vdwg.mxu0
        %v1366 = vsel %vm345, %v1170, 0
        %1368 = vmatpush.msra.mxu0 0.0
        %1369 = vmatpush.msra.mxu0 0.0
        %1370 = vmatpush.msra.mxu0 0.0
        %1371 = vmatpush.msra.mxu0 0.0
        %1372 = vmatpush.msra.mxu0 0.0
        %1373 = vmatpush.msra.mxu0 0.0
        %1374 = vmatpush.msra.mxu0 0.0
        %1375 = vmatpush.msra.mxu0 0.0
        %1376 = vmatpush.msra.mxu0 0.0
        %1377 = vmatpush.msra.mxu0 0.0
        %1378 = vmatpush.msra.mxu0 0.0
        %1379 = vmatpush.msra.mxu0 0.0
        %1380 = vmatpush.msra.mxu0 %v1317
        %1381 = vmatpush.msra.mxu0 %v1316
        %1382 = vmatpush.msra.mxu0 %v1315
        %1383 = vmatpush.msra.mxu0 %v1314
        %1384 = vmatmul.f32.gmra.mxu0 %v1366
        %v1385 = vpop.f32.mrf.mxu0
        %v1386 = vadd.f32 0.0, %v1385
        %1387 = vdwg.mxu0
        %v1389 = vsel %vm345, %v1193, 0
        %1391 = vmatpush.msra.mxu0 0.0
        %1392 = vmatpush.msra.mxu0 0.0
        %1393 = vmatpush.msra.mxu0 0.0
        %1394 = vmatpush.msra.mxu0 0.0
        %1395 = vmatpush.msra.mxu0 0.0
        %1396 = vmatpush.msra.mxu0 0.0
        %1397 = vmatpush.msra.mxu0 0.0
        %1398 = vmatpush.msra.mxu0 0.0
        %1399 = vmatpush.msra.mxu0 0.0
        %1400 = vmatpush.msra.mxu0 0.0
        %1401 = vmatpush.msra.mxu0 0.0
        %1402 = vmatpush.msra.mxu0 0.0
        %1403 = vmatpush.msra.mxu0 %v1321
        %1404 = vmatpush.msra.mxu0 %v1320
        %1405 = vmatpush.msra.mxu0 %v1319
        %1406 = vmatpush.msra.mxu0 %v1318
        %1407 = vmatmul.f32.gmra.mxu0 %v1389
        %v1408 = vpop.f32.mrf.mxu0
        %v1409 = vadd.f32 0.0, %v1408
        %1410 = vdwg.mxu0
        %v1412 = vsel %vm345, %v1216, 0
        %1414 = vmatpush.msra.mxu0 0.0
        %1415 = vmatpush.msra.mxu0 0.0
        %1416 = vmatpush.msra.mxu0 0.0
        %1417 = vmatpush.msra.mxu0 0.0
        %1418 = vmatpush.msra.mxu0 0.0
        %1419 = vmatpush.msra.mxu0 0.0
        %1420 = vmatpush.msra.mxu0 0.0
        %1421 = vmatpush.msra.mxu0 0.0
        %1422 = vmatpush.msra.mxu0 0.0
        %1423 = vmatpush.msra.mxu0 0.0
        %1424 = vmatpush.msra.mxu0 0.0
        %1425 = vmatpush.msra.mxu0 0.0
        %1426 = vmatpush.msra.mxu0 %v1325
        %1427 = vmatpush.msra.mxu0 %v1324
        %1428 = vmatpush.msra.mxu0 %v1323
        %1429 = vmatpush.msra.mxu0 %v1322
        %1430 = vmatmul.f32.gmra.mxu0 %v1412
        %v1431 = vpop.f32.mrf.mxu0
        %v1432 = vadd.f32 0.0, %v1431
        %1433 = vdwg.mxu0
        %v1435 = vsel %vm345, %v1239, 0
        %1437 = vmatpush.msra.mxu0 0.0
        %1438 = vmatpush.msra.mxu0 0.0
        %1439 = vmatpush.msra.mxu0 0.0
        %1440 = vmatpush.msra.mxu0 0.0
        %1441 = vmatpush.msra.mxu0 0.0
        %1442 = vmatpush.msra.mxu0 0.0
        %1443 = vmatpush.msra.mxu0 0.0
        %1444 = vmatpush.msra.mxu0 0.0
        %1445 = vmatpush.msra.mxu0 0.0
        %1446 = vmatpush.msra.mxu0 0.0
        %1447 = vmatpush.msra.mxu0 0.0
        %1448 = vmatpush.msra.mxu0 0.0
        %1449 = vmatpush.msra.mxu0 %v1329
        %1450 = vmatpush.msra.mxu0 %v1328
        %1451 = vmatpush.msra.mxu0 %v1327
        %1452 = vmatpush.msra.mxu0 %v1326
        %1453 = vmatmul.f32.gmra.mxu0 %v1435
        %v1454 = vpop.f32.mrf.mxu0
        %v1455 = vadd.f32 0.0, %v1454
        %1456 = vdwg.mxu0
        %v1458 = vsel %vm345, %v1262, 0
        %1460 = vmatpush.msra.mxu0 0.0
        %1461 = vmatpush.msra.mxu0 0.0
        %1462 = vmatpush.msra.mxu0 0.0
        %1463 = vmatpush.msra.mxu0 0.0
        %1464 = vmatpush.msra.mxu0 0.0
        %1465 = vmatpush.msra.mxu0 0.0
        %1466 = vmatpush.msra.mxu0 0.0
        %1467 = vmatpush.msra.mxu0 0.0
        %1468 = vmatpush.msra.mxu0 0.0
        %1469 = vmatpush.msra.mxu0 0.0
        %1470 = vmatpush.msra.mxu0 0.0
        %1471 = vmatpush.msra.mxu0 0.0
        %1472 = vmatpush.msra.mxu0 %v1333
        %1473 = vmatpush.msra.mxu0 %v1332
        %1474 = vmatpush.msra.mxu0 %v1331
        %1475 = vmatpush.msra.mxu0 %v1330
        %1476 = vmatmul.f32.gmra.mxu0 %v1458
        %v1477 = vpop.f32.mrf.mxu0
        %v1478 = vadd.f32 0.0, %v1477
        %1479 = vdwg.mxu0
        %v1481 = vsel %vm345, %v1285, 0
        %1483 = vmatpush.msra.mxu0 0.0
        %1484 = vmatpush.msra.mxu0 0.0
        %1485 = vmatpush.msra.mxu0 0.0
        %1486 = vmatpush.msra.mxu0 0.0
        %1487 = vmatpush.msra.mxu0 0.0
        %1488 = vmatpush.msra.mxu0 0.0
        %1489 = vmatpush.msra.mxu0 0.0
        %1490 = vmatpush.msra.mxu0 0.0
        %1491 = vmatpush.msra.mxu0 0.0
        %1492 = vmatpush.msra.mxu0 0.0
        %1493 = vmatpush.msra.mxu0 0.0
        %1494 = vmatpush.msra.mxu0 0.0
        %1495 = vmatpush.msra.mxu0 %v1337
        %1496 = vmatpush.msra.mxu0 %v1336
        %1497 = vmatpush.msra.mxu0 %v1335
        %1498 = vmatpush.msra.mxu0 %v1334
        %1499 = vmatmul.f32.gmra.mxu0 %v1481
        %v1500 = vpop.f32.mrf.mxu0
        %v1501 = vadd.f32 0.0, %v1500
        %1502 = vdwg.mxu0
        %v1504 = vsel %vm345, %v1308, 0
        %1506 = vmatpush.msra.mxu0 0.0
        %1507 = vmatpush.msra.mxu0 0.0
        %1508 = vmatpush.msra.mxu0 0.0
        %1509 = vmatpush.msra.mxu0 0.0
        %1510 = vmatpush.msra.mxu0 0.0
        %1511 = vmatpush.msra.mxu0 0.0
        %1512 = vmatpush.msra.mxu0 0.0
        %1513 = vmatpush.msra.mxu0 0.0
        %1514 = vmatpush.msra.mxu0 0.0
        %1515 = vmatpush.msra.mxu0 0.0
        %1516 = vmatpush.msra.mxu0 0.0
        %1517 = vmatpush.msra.mxu0 0.0
        %1518 = vmatpush.msra.mxu0 %v1341
        %1519 = vmatpush.msra.mxu0 %v1340
        %1520 = vmatpush.msra.mxu0 %v1339
        %1521 = vmatpush.msra.mxu0 %v1338
        %1522 = vmatmul.f32.gmra.mxu0 %v1504
        %v1523 = vpop.f32.mrf.mxu0
        %v1524 = vadd.f32 0.0, %v1523
        %1525 = vdwg.mxu0
        %v1526 = vsel %vm345, %v1363, 0.0
        %v1527 = vsel %vm345, %v1386, 0.0
        %v1528 = vadd.f32 %v1526, %v1527
        %v1529 = vsel %vm345, %v1409, 0.0
        %v1530 = vadd.f32 %v1528, %v1529
        %v1531 = vsel %vm345, %v1432, 0.0
        %v1532 = vadd.f32 %v1530, %v1531
        %v1533 = vsel %vm345, %v1455, 0.0
        %v1534 = vadd.f32 %v1532, %v1533
        %v1535 = vsel %vm345, %v1478, 0.0
        %v1536 = vadd.f32 %v1534, %v1535
        %v1537 = vsel %vm345, %v1501, 0.0
        %v1538 = vadd.f32 %v1536, %v1537
        %v1539 = vsel %vm345, %v1524, 0.0
        %v1540 = vadd.f32 %v1538, %v1539
        %v1541 = vld [vmem:[%s3] sm:$0x1]
        %v1543 = vperm.slane %v1541, 0
        %v1545 = vadd.f32 %v1540, %v1543
        %1546 = vst.msk [vmem:[%s247] sm:$0xff] %vm345, %v1545
        %s1547 = sand.u32 %s119, 1
        %s1548 = scalar_lea.sflag [#allocation4], %s1547
        %s1549 = sand.u32 %s119, 1
        %s1550 = smul.addr %s1549, 8
        %s1551 = scalar_lea.vmem [#allocation8], %s1550
        // Predicated region
        $region49: #{tpu_custom_call.1} parent=35 // pred_check
          %p1552 = pneg %p129
        $region50: #{tpu_custom_call.1} parent=35 // pred_check_branch
          %1554 = sbr.rel (%p1552) target = $region52
        $region51: #{tpu_custom_call.1} parent=35 // pred_region
          %1556 = vsyncadd %s1548, 0
          %s1557 = smul.addr %s22, 8
          %s1558 = scalar_lea.hbm %s4, %s1557
          %s1560 = sshll.u32 %s1551, 4
          %s1561 = int_to_ptr.vmem [resolvable:$true] %s1560
          %s1562 = sshll.u32 %s1558, 4
          %s1563 = int_to_ptr.hbm [resolvable:$true] %s1562
          %1565 = dma.vmem_to_hbm [thread:$0]  %s1561, 128, %s1563, %s1548
        $region52: #{tpu_custom_call.1} parent=35 // pred_fallthru
          _
      $region36: #{tpu_custom_call.1} parent=5 // pred_fallthru
        _
      %p1566 = scmp.le.s32.totalorder 2, %s17
      // Predicated region
      $region53: #{tpu_custom_call.1} parent=5 // pred_check
        %p1567 = pneg %p1566
      $region54: #{tpu_custom_call.1} parent=5 // pred_check_branch
        %1569 = sbr.rel (%p1567) target = $region56
      $region55: #{tpu_custom_call.1} parent=5 // pred_region
        %s1570 = ssub.s32 %s17, 2
        // Predicated region
        $region57: #{tpu_custom_call.1} parent=55 // pred_check
          %p1571 = pneg %p135
        $region58: #{tpu_custom_call.1} parent=55 // pred_check_branch
          %1573 = sbr.rel (%p1571) target = $region60
        $region59: #{tpu_custom_call.1} parent=55 // pred_region
          %s1574 = sand.u32 %s120, 1
          %s1575 = scalar_lea.sflag [#allocation4], %s1574
          %s1576 = sand.u32 %s120, 1
          %s1577 = smul.addr %s1576, 8
          %s1578 = scalar_lea.vmem [#allocation8], %s1577
          %1580 = dma.done %s1575, 128
        $region60: #{tpu_custom_call.1} parent=55 // pred_fallthru
          _
      $region56: #{tpu_custom_call.1} parent=5 // pred_fallthru
        _
    $region6: #{tpu_custom_call.1} parent=1 // loop_footer
      %s21 = sadd.s32 1, %s17
    $region7: #{tpu_custom_call.1} parent=1 // loop_footer_branch
      %16 = sbr.rel target = $region3
    $region8: #{tpu_custom_call.1} parent=1 // loop_exit
      _
    %1581 = vsyncpa [#allocation3], 1
    %s1582 = scalar_lea.sflag [#allocation3], 1
    %1583 = vsyncpa %s1582, 1
    %1584 = vsyncpa [#allocation6], 1
    %1585 = vsyncpa [#allocation4], 1
    %s1586 = scalar_lea.sflag [#allocation4], 1
    %1587 = vsyncpa %s1586, 1

</llo_original>
